<compile_context>
chip_gen: v6e
topology: v6e:2x2x1
jax: 0.10.0
libtpu: 0.0.40
codegen_flags: <defaults>
</compile_context>

<pallas_src>
import math

import jax
import jax.numpy as jnp
from jax.experimental import pallas as pl
from jax.experimental.pallas import tpu as pltpu

FEAT_DIM = 400           # backbone feature width (X3D -> 400 logits)
FEAT_PAD = 512           # K padded to a clean multiple of 128 for the MXU
H1 = 128
H2 = 64
NUM_HEADS = 5


def _gelu_exact(x):
    # Matches torch.nn.GELU() default (erf-based, non-approximate).
    return 0.5 * x * (1.0 + jax.lax.erf(x * (1.0 / math.sqrt(2.0))))


def heads_kernel(feat_ref, w1_ref, b1_ref, w2_ref, b2_ref, w3_ref, b3_ref, out_ref):
    # feat_ref: (B, 512)        features, zero-padded K (shared by all heads)
    # w1_ref:   (512, 640)      all-head layer-1 weight  (head h -> cols h*128:(h+1)*128)
    # b1_ref:   (1, 640)
    # w2_ref:   (5, 128, 64)    per-head layer-2 weights
    # b2_ref:   (5, 64)
    # w3_ref:   (5, 64)         per-head layer-3 weight rows (squeezed)
    # b3_ref:   (1, 5)          per-head layer-3 bias
    # out_ref:  (B, 5)
    feat = feat_ref[...]

    # Layer 1: one wide lane-dense MXU matmul for all 5 heads at once.
    h1 = jnp.dot(feat, w1_ref[...], preferred_element_type=jnp.float32) + b1_ref[...]
    h1 = _gelu_exact(h1)                                   # (B, 640)
    # Dropout(0.2) -> identity in eval mode.

    # Layers 2 & 3: unrolled over the 5 heads on VMEM-resident weights.
    cols = []
    for h in range(NUM_HEADS):
        x = h1[:, h * H1:(h + 1) * H1]                     # (B, 128) static lane slice
        y = jnp.dot(x, w2_ref[h], preferred_element_type=jnp.float32)
        y = y + b2_ref[pl.ds(h, 1), :]                     # (B, 64)
        y = _gelu_exact(y)
        # Dropout(0.2) -> identity in eval mode.
        # Final Linear(64, 1): VPU multiply + lane reduce (avoids N=1 MXU matmul).
        o = jnp.sum(y * w3_ref[pl.ds(h, 1), :], axis=-1, keepdims=True)  # (B, 1)
        cols.append(o)

    # Single lane-contiguous store of all head outputs, already in torch.cat order.
    out_ref[...] = jnp.concatenate(cols, axis=-1) + b3_ref[...]          # (B, 5)


def run_heads(features, fused):
    """features: (B, 400). `fused` holds the pre-fused/stacked head params."""
    B = features.shape[0]
    # Zero-pad K from 400 -> 512 outside the kernel (w1 rows 400..511 are zero).
    feat_p = jnp.pad(features, ((0, 0), (0, FEAT_PAD - FEAT_DIM)))

    out = pl.pallas_call(
        heads_kernel,
        out_shape=jax.ShapeDtypeStruct((B, NUM_HEADS), jnp.float32),
        grid_spec=pltpu.PrefetchScalarGridSpec(
            num_scalar_prefetch=0,
            grid=(1,),  # single invocation: all heads fused, weights stay resident
            in_specs=[
                pl.BlockSpec((B, FEAT_PAD), lambda i: (0, 0)),
                pl.BlockSpec((FEAT_PAD, NUM_HEADS * H1), lambda i: (0, 0)),
                pl.BlockSpec((1, NUM_HEADS * H1), lambda i: (0, 0)),
                pl.BlockSpec((NUM_HEADS, H1, H2), lambda i: (0, 0, 0)),
                pl.BlockSpec((NUM_HEADS, H2), lambda i: (0, 0)),
                pl.BlockSpec((NUM_HEADS, H2), lambda i: (0, 0)),
                pl.BlockSpec((1, NUM_HEADS), lambda i: (0, 0)),
            ],
            out_specs=pl.BlockSpec((B, NUM_HEADS), lambda i: (0, 0)),
        ),
        compiler_params=pltpu.CompilerParams(
            dimension_semantics=("arbitrary",),
        ),
    )(feat_p, fused["w1_cat"], fused["b1_cat"], fused["w2"], fused["b2"],
      fused["w3"], fused["b3_row"])
    return out  # (B, 5) — matches torch.cat([out1..out5], dim=1)


def surrogate_feature_extractor(frames, proj_w, proj_b):
    # Stand-in for the pretrained X3D backbone: global mean pool over (T, H, W)
    # followed by a linear projection C -> 400.  (Plain-JAX glue.)
    pooled = jnp.mean(frames, axis=(2, 3, 4))  # (B, C)
    return pooled @ proj_w + proj_b            # (B, 400)


def fuse_head_params(params):
    """One-time repack of the per-head params into the fused kernel layout."""
    # (5, 400, 128) -> (400, 5, 128) -> (400, 640); pad K to 512 with zero rows.
    w1_cat = jnp.transpose(params["w1"], (1, 0, 2)).reshape(FEAT_DIM, NUM_HEADS * H1)
    w1_cat = jnp.pad(w1_cat, ((0, FEAT_PAD - FEAT_DIM), (0, 0)))
    b1_cat = params["b1"].reshape(1, NUM_HEADS * H1)        # (1, 640)
    w3 = params["w3"][:, :, 0]                              # (5, 64)
    b3_row = params["b3"].reshape(1, NUM_HEADS)             # (1, 5)
    return dict(w1_cat=w1_cat, b1_cat=b1_cat,
                w2=params["w2"], b2=params["b2"],
                w3=w3, b3_row=b3_row)


def init_params(key):
    ks = jax.random.split(key, 16)
    C = 3

    def lin(k, fan_in, fan_out):
        kw, kb = jax.random.split(k)
        bound = 1.0 / math.sqrt(fan_in)
        w = jax.random.uniform(kw, (fan_in, fan_out), jnp.float32, -bound, bound)
        b = jax.random.uniform(kb, (fan_out,), jnp.float32, -bound, bound)
        return w, b

    proj_w, proj_b = lin(ks[0], C, FEAT_DIM)

    w1s, b1s, w2s, b2s, w3s, b3s = [], [], [], [], [], []
    for h in range(NUM_HEADS):
        w1, b1 = lin(ks[1 + 3 * h], FEAT_DIM, H1)
        w2, b2 = lin(ks[2 + 3 * h], H1, H2)
        w3, b3 = lin(ks[3 + 3 * h], H2, 1)
        w1s.append(w1); b1s.append(b1)
        w2s.append(w2); b2s.append(b2)
        w3s.append(w3); b3s.append(b3)

    return dict(
        proj_w=proj_w,
        proj_b=proj_b,
        w1=jnp.stack(w1s),  # (5, 400, 128)
        b1=jnp.stack(b1s),  # (5, 128)
        w2=jnp.stack(w2s),  # (5, 128, 64)
        b2=jnp.stack(b2s),  # (5, 64)
        w3=jnp.stack(w3s),  # (5, 64, 1)
        b3=jnp.stack(b3s),  # (5, 1)
    )


def x3d_model_forward(frames, params, fused=None):
    # NOTE: if B ever grows large, add a batch grid axis (marked "parallel")
    # with 128-256 row tiles while keeping the heads fused; heads alone carry
    # too little work to shard.
    if fused is None:
        fused = fuse_head_params(params)
    features = surrogate_feature_extractor(frames, params["proj_w"], params["proj_b"])
    features = features.reshape(features.shape[0], -1)  # flatten(start_dim=1)
    return run_heads(features, fused)


if __name__ == "__main__":
    key = jax.random.PRNGKey(0)
    kp, kx = jax.random.split(key)

    params = init_params(kp)
    fused = fuse_head_params(params)   # one-time repack (done at init, not per step)

    # Small video-like input: (B, C, T, H, W)
    frames = jax.random.normal(kx, (2, 3, 4, 16, 16), dtype=jnp.float32)

    out = x3d_model_forward(frames, params, fused)
    out = jax.block_until_ready(out)

    assert out.shape == (2, 5), out.shape

    # Pure-JAX reference of the head MLPs for a sanity check.
    feats = surrogate_feature_extractor(frames, params["proj_w"], params["proj_b"])
    ref_cols = []
    for h in range(NUM_HEADS):
        x = feats @ params["w1"][h] + params["b1"][h]
        x = 0.5 * x * (1.0 + jax.lax.erf(x / math.sqrt(2.0)))
        x = x @ params["w2"][h] + params["b2"][h]
        x = 0.5 * x * (1.0 + jax.lax.erf(x / math.sqrt(2.0)))
        x = x @ params["w3"][h] + params["b3"][h]
        ref_cols.append(x)
    ref = jnp.concatenate(ref_cols, axis=1)

    assert jnp.allclose(out, ref, atol=1e-4, rtol=1e-4), (out, ref)

    print("KERNEL_OK")
</pallas_src>

<mosaic_0001>
module attributes {stable_mosaic.version = 11 : i64} {
  func.func @heads_kernel(%arg0: i32, %arg1: memref<2x512xf32, #tpu.memory_space<vmem>>, %arg2: memref<512x640xf32, #tpu.memory_space<vmem>>, %arg3: memref<1x640xf32, #tpu.memory_space<vmem>>, %arg4: memref<5x128x64xf32, #tpu.memory_space<vmem>>, %arg5: memref<5x64xf32, #tpu.memory_space<vmem>>, %arg6: memref<5x64xf32, #tpu.memory_space<vmem>>, %arg7: memref<1x5xf32, #tpu.memory_space<vmem>>, %arg8: memref<2x5xf32, #tpu.memory_space<vmem>>) attributes {dimension_semantics = [#tpu.dimension_semantics<arbitrary>], iteration_bounds = array<i64: 1>, scalar_prefetch = 0 : i64, scratch_operands = 0 : i64, tpu.core_type = #tpu.core_type<tc>, window_params = [{pipeline_mode = #tpu.pipeline_mode<synchronous>, transform_indices = @transform_0, window_bounds = array<i64: 2, 512>}, {pipeline_mode = #tpu.pipeline_mode<synchronous>, transform_indices = @transform_1, window_bounds = array<i64: 512, 640>}, {pipeline_mode = #tpu.pipeline_mode<synchronous>, transform_indices = @transform_2, window_bounds = array<i64: 1, 640>}, {pipeline_mode = #tpu.pipeline_mode<synchronous>, transform_indices = @transform_3, window_bounds = array<i64: 5, 128, 64>}, {pipeline_mode = #tpu.pipeline_mode<synchronous>, transform_indices = @transform_4, window_bounds = array<i64: 5, 64>}, {pipeline_mode = #tpu.pipeline_mode<synchronous>, transform_indices = @transform_5, window_bounds = array<i64: 5, 64>}, {pipeline_mode = #tpu.pipeline_mode<synchronous>, transform_indices = @transform_6, window_bounds = array<i64: 1, 5>}, {pipeline_mode = #tpu.pipeline_mode<synchronous>, transform_indices = @transform_7, window_bounds = array<i64: 2, 5>}]} {
    %c0 = arith.constant 0 : index
    %c0_0 = arith.constant 0 : index
    %0 = vector.load %arg1[%c0, %c0_0] : memref<2x512xf32, #tpu.memory_space<vmem>>, vector<2x512xf32>
    %c0_1 = arith.constant 0 : index
    %c0_2 = arith.constant 0 : index
    %1 = vector.load %arg2[%c0_1, %c0_2] : memref<512x640xf32, #tpu.memory_space<vmem>>, vector<512x640xf32>
    %cst = arith.constant dense<0.000000e+00> : vector<2x640xf32>
    %2 = tpu.matmul %0, %1, %cst {dimension_numbers = #tpu.dot_dimension_numbers<[1], [0], [0], [1], [0, 0, 1, 1], [], []>} : vector<2x512xf32>, vector<512x640xf32>, vector<2x640xf32> -> vector<2x640xf32>
    %c0_3 = arith.constant 0 : index
    %c0_4 = arith.constant 0 : index
    %3 = vector.load %arg3[%c0_3, %c0_4] : memref<1x640xf32, #tpu.memory_space<vmem>>, vector<1x640xf32>
    %4 = vector.broadcast %3 : vector<1x640xf32> to vector<2x640xf32>
    %5 = arith.addf %2, %4 : vector<2x640xf32>
    %cst_5 = arith.constant 5.000000e-01 : f32
    %6 = vector.broadcast %cst_5 : f32 to vector<2x640xf32>
    %7 = arith.mulf %6, %5 : vector<2x640xf32>
    %cst_6 = arith.constant 0.707106769 : f32
    %8 = vector.broadcast %cst_6 : f32 to vector<2x640xf32>
    %9 = arith.mulf %5, %8 : vector<2x640xf32>
    %10 = math.erf %9 : vector<2x640xf32>
    %cst_7 = arith.constant 1.000000e+00 : f32
    %11 = vector.broadcast %cst_7 : f32 to vector<2x640xf32>
    %12 = arith.addf %11, %10 : vector<2x640xf32>
    %13 = arith.mulf %7, %12 : vector<2x640xf32>
    %14 = vector.extract_strided_slice %13 {offsets = [0, 0], sizes = [2, 128], strides = [1, 1]} : vector<2x640xf32> to vector<2x128xf32>
    %c0_8 = arith.constant 0 : index
    %c0_9 = arith.constant 0 : index
    %c0_10 = arith.constant 0 : index
    %15 = vector.load %arg4[%c0_8, %c0_9, %c0_10] : memref<5x128x64xf32, #tpu.memory_space<vmem>>, vector<1x128x64xf32>
    %16 = vector.shape_cast %15 : vector<1x128x64xf32> to vector<128x64xf32>
    %cst_11 = arith.constant dense<0.000000e+00> : vector<2x64xf32>
    %17 = tpu.matmul %14, %16, %cst_11 {dimension_numbers = #tpu.dot_dimension_numbers<[1], [0], [0], [1], [0, 0, 1, 1], [], []>} : vector<2x128xf32>, vector<128x64xf32>, vector<2x64xf32> -> vector<2x64xf32>
    %c0_12 = arith.constant 0 : index
    %c0_13 = arith.constant 0 : index
    %18 = vector.load %arg5[%c0_12, %c0_13] : memref<5x64xf32, #tpu.memory_space<vmem>>, vector<1x64xf32>
    %19 = vector.broadcast %18 : vector<1x64xf32> to vector<2x64xf32>
    %20 = arith.addf %17, %19 : vector<2x64xf32>
    %cst_14 = arith.constant 5.000000e-01 : f32
    %21 = vector.broadcast %cst_14 : f32 to vector<2x64xf32>
    %22 = arith.mulf %21, %20 : vector<2x64xf32>
    %cst_15 = arith.constant 0.707106769 : f32
    %23 = vector.broadcast %cst_15 : f32 to vector<2x64xf32>
    %24 = arith.mulf %20, %23 : vector<2x64xf32>
    %25 = math.erf %24 : vector<2x64xf32>
    %cst_16 = arith.constant 1.000000e+00 : f32
    %26 = vector.broadcast %cst_16 : f32 to vector<2x64xf32>
    %27 = arith.addf %26, %25 : vector<2x64xf32>
    %28 = arith.mulf %22, %27 : vector<2x64xf32>
    %c0_17 = arith.constant 0 : index
    %c0_18 = arith.constant 0 : index
    %29 = vector.load %arg6[%c0_17, %c0_18] : memref<5x64xf32, #tpu.memory_space<vmem>>, vector<1x64xf32>
    %30 = vector.broadcast %29 : vector<1x64xf32> to vector<2x64xf32>
    %31 = arith.mulf %28, %30 : vector<2x64xf32>
    %cst_19 = arith.constant dense<0.000000e+00> : vector<2xf32>
    %32 = vector.multi_reduction <add>, %31, %cst_19 [1] : vector<2x64xf32> to vector<2xf32>
    %33 = vector.shape_cast %32 : vector<2xf32> to vector<2x1xf32>
    %34 = vector.extract_strided_slice %13 {offsets = [0, 128], sizes = [2, 128], strides = [1, 1]} : vector<2x640xf32> to vector<2x128xf32>
    %c1 = arith.constant 1 : index
    %c0_20 = arith.constant 0 : index
    %c0_21 = arith.constant 0 : index
    %35 = vector.load %arg4[%c1, %c0_20, %c0_21] : memref<5x128x64xf32, #tpu.memory_space<vmem>>, vector<1x128x64xf32>
    %36 = vector.shape_cast %35 : vector<1x128x64xf32> to vector<128x64xf32>
    %cst_22 = arith.constant dense<0.000000e+00> : vector<2x64xf32>
    %37 = tpu.matmul %34, %36, %cst_22 {dimension_numbers = #tpu.dot_dimension_numbers<[1], [0], [0], [1], [0, 0, 1, 1], [], []>} : vector<2x128xf32>, vector<128x64xf32>, vector<2x64xf32> -> vector<2x64xf32>
    %c1_23 = arith.constant 1 : index
    %c0_24 = arith.constant 0 : index
    %38 = vector.load %arg5[%c1_23, %c0_24] : memref<5x64xf32, #tpu.memory_space<vmem>>, vector<1x64xf32>
    %39 = vector.broadcast %38 : vector<1x64xf32> to vector<2x64xf32>
    %40 = arith.addf %37, %39 : vector<2x64xf32>
    %cst_25 = arith.constant 5.000000e-01 : f32
    %41 = vector.broadcast %cst_25 : f32 to vector<2x64xf32>
    %42 = arith.mulf %41, %40 : vector<2x64xf32>
    %cst_26 = arith.constant 0.707106769 : f32
    %43 = vector.broadcast %cst_26 : f32 to vector<2x64xf32>
    %44 = arith.mulf %40, %43 : vector<2x64xf32>
    %45 = math.erf %44 : vector<2x64xf32>
    %cst_27 = arith.constant 1.000000e+00 : f32
    %46 = vector.broadcast %cst_27 : f32 to vector<2x64xf32>
    %47 = arith.addf %46, %45 : vector<2x64xf32>
    %48 = arith.mulf %42, %47 : vector<2x64xf32>
    %c1_28 = arith.constant 1 : index
    %c0_29 = arith.constant 0 : index
    %49 = vector.load %arg6[%c1_28, %c0_29] : memref<5x64xf32, #tpu.memory_space<vmem>>, vector<1x64xf32>
    %50 = vector.broadcast %49 : vector<1x64xf32> to vector<2x64xf32>
    %51 = arith.mulf %48, %50 : vector<2x64xf32>
    %cst_30 = arith.constant dense<0.000000e+00> : vector<2xf32>
    %52 = vector.multi_reduction <add>, %51, %cst_30 [1] : vector<2x64xf32> to vector<2xf32>
    %53 = vector.shape_cast %52 : vector<2xf32> to vector<2x1xf32>
    %54 = vector.extract_strided_slice %13 {offsets = [0, 256], sizes = [2, 128], strides = [1, 1]} : vector<2x640xf32> to vector<2x128xf32>
    %c2 = arith.constant 2 : index
    %c0_31 = arith.constant 0 : index
    %c0_32 = arith.constant 0 : index
    %55 = vector.load %arg4[%c2, %c0_31, %c0_32] : memref<5x128x64xf32, #tpu.memory_space<vmem>>, vector<1x128x64xf32>
    %56 = vector.shape_cast %55 : vector<1x128x64xf32> to vector<128x64xf32>
    %cst_33 = arith.constant dense<0.000000e+00> : vector<2x64xf32>
    %57 = tpu.matmul %54, %56, %cst_33 {dimension_numbers = #tpu.dot_dimension_numbers<[1], [0], [0], [1], [0, 0, 1, 1], [], []>} : vector<2x128xf32>, vector<128x64xf32>, vector<2x64xf32> -> vector<2x64xf32>
    %c2_34 = arith.constant 2 : index
    %c0_35 = arith.constant 0 : index
    %58 = vector.load %arg5[%c2_34, %c0_35] : memref<5x64xf32, #tpu.memory_space<vmem>>, vector<1x64xf32>
    %59 = vector.broadcast %58 : vector<1x64xf32> to vector<2x64xf32>
    %60 = arith.addf %57, %59 : vector<2x64xf32>
    %cst_36 = arith.constant 5.000000e-01 : f32
    %61 = vector.broadcast %cst_36 : f32 to vector<2x64xf32>
    %62 = arith.mulf %61, %60 : vector<2x64xf32>
    %cst_37 = arith.constant 0.707106769 : f32
    %63 = vector.broadcast %cst_37 : f32 to vector<2x64xf32>
    %64 = arith.mulf %60, %63 : vector<2x64xf32>
    %65 = math.erf %64 : vector<2x64xf32>
    %cst_38 = arith.constant 1.000000e+00 : f32
    %66 = vector.broadcast %cst_38 : f32 to vector<2x64xf32>
    %67 = arith.addf %66, %65 : vector<2x64xf32>
    %68 = arith.mulf %62, %67 : vector<2x64xf32>
    %c2_39 = arith.constant 2 : index
    %c0_40 = arith.constant 0 : index
    %69 = vector.load %arg6[%c2_39, %c0_40] : memref<5x64xf32, #tpu.memory_space<vmem>>, vector<1x64xf32>
    %70 = vector.broadcast %69 : vector<1x64xf32> to vector<2x64xf32>
    %71 = arith.mulf %68, %70 : vector<2x64xf32>
    %cst_41 = arith.constant dense<0.000000e+00> : vector<2xf32>
    %72 = vector.multi_reduction <add>, %71, %cst_41 [1] : vector<2x64xf32> to vector<2xf32>
    %73 = vector.shape_cast %72 : vector<2xf32> to vector<2x1xf32>
    %74 = vector.extract_strided_slice %13 {offsets = [0, 384], sizes = [2, 128], strides = [1, 1]} : vector<2x640xf32> to vector<2x128xf32>
    %c3 = arith.constant 3 : index
    %c0_42 = arith.constant 0 : index
    %c0_43 = arith.constant 0 : index
    %75 = vector.load %arg4[%c3, %c0_42, %c0_43] : memref<5x128x64xf32, #tpu.memory_space<vmem>>, vector<1x128x64xf32>
    %76 = vector.shape_cast %75 : vector<1x128x64xf32> to vector<128x64xf32>
    %cst_44 = arith.constant dense<0.000000e+00> : vector<2x64xf32>
    %77 = tpu.matmul %74, %76, %cst_44 {dimension_numbers = #tpu.dot_dimension_numbers<[1], [0], [0], [1], [0, 0, 1, 1], [], []>} : vector<2x128xf32>, vector<128x64xf32>, vector<2x64xf32> -> vector<2x64xf32>
    %c3_45 = arith.constant 3 : index
    %c0_46 = arith.constant 0 : index
    %78 = vector.load %arg5[%c3_45, %c0_46] : memref<5x64xf32, #tpu.memory_space<vmem>>, vector<1x64xf32>
    %79 = vector.broadcast %78 : vector<1x64xf32> to vector<2x64xf32>
    %80 = arith.addf %77, %79 : vector<2x64xf32>
    %cst_47 = arith.constant 5.000000e-01 : f32
    %81 = vector.broadcast %cst_47 : f32 to vector<2x64xf32>
    %82 = arith.mulf %81, %80 : vector<2x64xf32>
    %cst_48 = arith.constant 0.707106769 : f32
    %83 = vector.broadcast %cst_48 : f32 to vector<2x64xf32>
    %84 = arith.mulf %80, %83 : vector<2x64xf32>
    %85 = math.erf %84 : vector<2x64xf32>
    %cst_49 = arith.constant 1.000000e+00 : f32
    %86 = vector.broadcast %cst_49 : f32 to vector<2x64xf32>
    %87 = arith.addf %86, %85 : vector<2x64xf32>
    %88 = arith.mulf %82, %87 : vector<2x64xf32>
    %c3_50 = arith.constant 3 : index
    %c0_51 = arith.constant 0 : index
    %89 = vector.load %arg6[%c3_50, %c0_51] : memref<5x64xf32, #tpu.memory_space<vmem>>, vector<1x64xf32>
    %90 = vector.broadcast %89 : vector<1x64xf32> to vector<2x64xf32>
    %91 = arith.mulf %88, %90 : vector<2x64xf32>
    %cst_52 = arith.constant dense<0.000000e+00> : vector<2xf32>
    %92 = vector.multi_reduction <add>, %91, %cst_52 [1] : vector<2x64xf32> to vector<2xf32>
    %93 = vector.shape_cast %92 : vector<2xf32> to vector<2x1xf32>
    %94 = vector.extract_strided_slice %13 {offsets = [0, 512], sizes = [2, 128], strides = [1, 1]} : vector<2x640xf32> to vector<2x128xf32>
    %c4 = arith.constant 4 : index
    %c0_53 = arith.constant 0 : index
    %c0_54 = arith.constant 0 : index
    %95 = vector.load %arg4[%c4, %c0_53, %c0_54] : memref<5x128x64xf32, #tpu.memory_space<vmem>>, vector<1x128x64xf32>
    %96 = vector.shape_cast %95 : vector<1x128x64xf32> to vector<128x64xf32>
    %cst_55 = arith.constant dense<0.000000e+00> : vector<2x64xf32>
    %97 = tpu.matmul %94, %96, %cst_55 {dimension_numbers = #tpu.dot_dimension_numbers<[1], [0], [0], [1], [0, 0, 1, 1], [], []>} : vector<2x128xf32>, vector<128x64xf32>, vector<2x64xf32> -> vector<2x64xf32>
    %c4_56 = arith.constant 4 : index
    %c0_57 = arith.constant 0 : index
    %98 = vector.load %arg5[%c4_56, %c0_57] : memref<5x64xf32, #tpu.memory_space<vmem>>, vector<1x64xf32>
    %99 = vector.broadcast %98 : vector<1x64xf32> to vector<2x64xf32>
    %100 = arith.addf %97, %99 : vector<2x64xf32>
    %cst_58 = arith.constant 5.000000e-01 : f32
    %101 = vector.broadcast %cst_58 : f32 to vector<2x64xf32>
    %102 = arith.mulf %101, %100 : vector<2x64xf32>
    %cst_59 = arith.constant 0.707106769 : f32
    %103 = vector.broadcast %cst_59 : f32 to vector<2x64xf32>
    %104 = arith.mulf %100, %103 : vector<2x64xf32>
    %105 = math.erf %104 : vector<2x64xf32>
    %cst_60 = arith.constant 1.000000e+00 : f32
    %106 = vector.broadcast %cst_60 : f32 to vector<2x64xf32>
    %107 = arith.addf %106, %105 : vector<2x64xf32>
    %108 = arith.mulf %102, %107 : vector<2x64xf32>
    %c4_61 = arith.constant 4 : index
    %c0_62 = arith.constant 0 : index
    %109 = vector.load %arg6[%c4_61, %c0_62] : memref<5x64xf32, #tpu.memory_space<vmem>>, vector<1x64xf32>
    %110 = vector.broadcast %109 : vector<1x64xf32> to vector<2x64xf32>
    %111 = arith.mulf %108, %110 : vector<2x64xf32>
    %cst_63 = arith.constant dense<0.000000e+00> : vector<2xf32>
    %112 = vector.multi_reduction <add>, %111, %cst_63 [1] : vector<2x64xf32> to vector<2xf32>
    %113 = vector.shape_cast %112 : vector<2xf32> to vector<2x1xf32>
    %114 = tpu.concatenate %33, %53, %73, %93, %113 in 1 : vector<2x1xf32>, vector<2x1xf32>, vector<2x1xf32>, vector<2x1xf32>, vector<2x1xf32> -> vector<2x5xf32>
    %c0_64 = arith.constant 0 : index
    %c0_65 = arith.constant 0 : index
    %115 = vector.load %arg7[%c0_64, %c0_65] : memref<1x5xf32, #tpu.memory_space<vmem>>, vector<1x5xf32>
    %116 = vector.broadcast %115 : vector<1x5xf32> to vector<2x5xf32>
    %117 = arith.addf %114, %116 : vector<2x5xf32>
    %c0_66 = arith.constant 0 : index
    %c0_67 = arith.constant 0 : index
    %118 = vector.load %arg8[%c0_66, %c0_67] : memref<2x5xf32, #tpu.memory_space<vmem>>, vector<2x5xf32>
    tpu.vector_store %arg8[%c0_66, %c0_67], %117 {strides = array<i32>} : memref<2x5xf32, #tpu.memory_space<vmem>>, vector<2x5xf32>,
    return
  }
  func.func @transform_0(%arg0: i32) -> (i32, i32) {
    %c0_i32 = arith.constant 0 : i32
    %c0_i32_0 = arith.constant 0 : i32
    %c0_i32_1 = arith.constant 0 : i32
    return %c0_i32, %c0_i32_0 : i32, i32
  }
  func.func @transform_1(%arg0: i32) -> (i32, i32) {
    %c0_i32 = arith.constant 0 : i32
    %c0_i32_0 = arith.constant 0 : i32
    %c0_i32_1 = arith.constant 0 : i32
    return %c0_i32, %c0_i32_0 : i32, i32
  }
  func.func @transform_2(%arg0: i32) -> (i32, i32) {
    %c0_i32 = arith.constant 0 : i32
    %c0_i32_0 = arith.constant 0 : i32
    %c0_i32_1 = arith.constant 0 : i32
    return %c0_i32, %c0_i32_0 : i32, i32
  }
  func.func @transform_3(%arg0: i32) -> (i32, i32, i32) {
    %c0_i32 = arith.constant 0 : i32
    %c0_i32_0 = arith.constant 0 : i32
    %c0_i32_1 = arith.constant 0 : i32
    %c0_i32_2 = arith.constant 0 : i32
    return %c0_i32, %c0_i32_0, %c0_i32_1 : i32, i32, i32
  }
  func.func @transform_4(%arg0: i32) -> (i32, i32) {
    %c0_i32 = arith.constant 0 : i32
    %c0_i32_0 = arith.constant 0 : i32
    %c0_i32_1 = arith.constant 0 : i32
    return %c0_i32, %c0_i32_0 : i32, i32
  }
  func.func @transform_5(%arg0: i32) -> (i32, i32) {
    %c0_i32 = arith.constant 0 : i32
    %c0_i32_0 = arith.constant 0 : i32
    %c0_i32_1 = arith.constant 0 : i32
    return %c0_i32, %c0_i32_0 : i32, i32
  }
  func.func @transform_6(%arg0: i32) -> (i32, i32) {
    %c0_i32 = arith.constant 0 : i32
    %c0_i32_0 = arith.constant 0 : i32
    %c0_i32_1 = arith.constant 0 : i32
    return %c0_i32, %c0_i32_0 : i32, i32
  }
  func.func @transform_7(%arg0: i32) -> (i32, i32) {
    %c0_i32 = arith.constant 0 : i32
    %c0_i32_0 = arith.constant 0 : i32
    %c0_i32_1 = arith.constant 0 : i32
    return %c0_i32, %c0_i32_0 : i32, i32
  }
}

</mosaic_0001>

<llo_original>
// kernel: tpu_custom_call.1
$region0: #{tpu_custom_call.1}
  #allocation0 [shape = 'u32[]', space=smem, size = 0x4, offset = 0x4, fixed_abs, tag = 'smem constant byte address 0x4 - core index']
  #allocation1 [shape = 'u32[144,128]{1,0:T(1,128)}', space=vmem, size = 0x12000, scoped, tag = 'internal scratch']
  %s0 = inlined_call_operand.hbm [shape: f32[2,512], index: 0, kind: input, shape index: {}]
  %s1 = inlined_call_operand.hbm [shape: f32[512,640], index: 1, kind: input, shape index: {}]
  %s2 = inlined_call_operand.hbm [shape: f32[1,640], index: 2, kind: input, shape index: {}]
  %s3 = inlined_call_operand.vmem [shape: f32[5,128,64], index: 3, kind: input, shape index: {}]
  %s4 = inlined_call_operand.hbm [shape: f32[5,64], index: 4, kind: input, shape index: {}]
  %s5 = inlined_call_operand.hbm [shape: f32[5,64], index: 5, kind: input, shape index: {}]
  %s6 = inlined_call_operand.hbm [shape: f32[1,5], index: 6, kind: input, shape index: {}]
  %s7 = inlined_call_operand.hbm [shape: f32[2,5], index: 7, kind: output, shape index: {}]
  %s8 = sld [smem:[#allocation0]]
  $region62: #{tpu_custom_call.1} parent=0
    _
  %s10 = ssub.s32 1, %s8
  %s11 = scalar_select 0, %s10, %s8
  $region1: #{tpu_custom_call.1} parent=0
    #allocation2 [shape = 'u8[4096]{0}', space=vmem, size = 0x1000, scoped, tag = 'input window, operand 0, single buffered']
    #allocation3 [shape = 's32[1]{0}', space=sflag, size = 0x4, scoped, tag = 'scoped memory for tpu_custom_call.1']
    #allocation4 [shape = 's32[1]{0}', space=sflag, size = 0x4, scoped, tag = 'scoped memory for tpu_custom_call.1']
    #allocation5 [shape = 'u8[1310720]{0}', space=vmem, size = 0x140000, scoped, tag = 'input window, operand 1, single buffered']
    #allocation6 [shape = 's32[1]{0}', space=sflag, size = 0x4, scoped, tag = 'scoped memory for tpu_custom_call.1']
    #allocation7 [shape = 'u8[2560]{0}', space=vmem, size = 0xc00, scoped, tag = 'input window, operand 2, single buffered']
    #allocation8 [shape = 'u8[4096]{0}', space=vmem, size = 0x1000, scoped, tag = 'input window, operand 4, single buffered']
    #allocation9 [shape = 's32[1]{0}', space=sflag, size = 0x4, scoped, tag = 'scoped memory for tpu_custom_call.1']
    #allocation10 [shape = 'u8[4096]{0}', space=vmem, size = 0x1000, scoped, tag = 'input window, operand 5, single buffered']
    #allocation11 [shape = 'u8[512]{0}', space=vmem, size = 0x400, scoped, tag = 'input window, operand 6, single buffered']
    #allocation12 [shape = 's32[1]{0}', space=sflag, size = 0x4, scoped, tag = 'scoped memory for tpu_custom_call.1']
    #allocation13 [shape = 'u8[1024]{0}', space=vmem, size = 0x400, scoped, tag = 'output window, operand 0, single buffered']
    %12 = vsyncpa [#allocation3], 0
    %13 = vsyncpa [#allocation6], 0
    %14 = vsyncpa [#allocation9], 0
    %15 = vsyncpa [#allocation12], 0
    %16 = vsyncpa [#allocation4], 0
    // Predicated region
    $region2: #{tpu_custom_call.1} parent=1 // pred_check
      _
    $region3: #{tpu_custom_call.1} parent=1 // pred_check_branch
      %18 = sbr.rel (0) target = $region5
    $region4: #{tpu_custom_call.1} parent=1 // pred_region
      %s20 = ssub.s32 128, 128
      %21 = vsyncadd [#allocation3], %s20
      %s23 = sshll.u32 [#allocation2], 4
      %s24 = int_to_ptr.vmem [resolvable:$true] %s23
      %26 = dma.hbm_to_vmem [thread:$0]  %s0, 128, %s24, [#allocation3]
    $region5: #{tpu_custom_call.1} parent=1 // pred_fallthru
      _
    // Predicated region
    $region6: #{tpu_custom_call.1} parent=1 // pred_check
      _
    $region7: #{tpu_custom_call.1} parent=1 // pred_check_branch
      %28 = sbr.rel (0) target = $region9
    $region8: #{tpu_custom_call.1} parent=1 // pred_region
      %s30 = ssub.s32 40960, 40960
      %31 = vsyncadd [#allocation6], %s30
      %s32 = sshll.u32 [#allocation5], 4
      %s33 = int_to_ptr.vmem [resolvable:$true] %s32
      %38 = dma.hbm_to_vmem [thread:$0]  %s1, 40960, %s33, [#allocation6], 640, 640, 40
    $region9: #{tpu_custom_call.1} parent=1 // pred_fallthru
      _
    // Predicated region
    $region10: #{tpu_custom_call.1} parent=1 // pred_check
      _
    $region11: #{tpu_custom_call.1} parent=1 // pred_check_branch
      %40 = sbr.rel (0) target = $region13
    $region12: #{tpu_custom_call.1} parent=1 // pred_region
      %s42 = ssub.s32 80, 80
      %43 = vsyncadd [#allocation6], %s42
      %s45 = sshll.u32 [#allocation7], 4
      %s46 = int_to_ptr.vmem [resolvable:$true] %s45
      %48 = dma.hbm_to_vmem [thread:$0]  %s2, 80, %s46, [#allocation6]
    $region13: #{tpu_custom_call.1} parent=1 // pred_fallthru
      _
    // Predicated region
    $region14: #{tpu_custom_call.1} parent=1 // pred_check
      _
    $region15: #{tpu_custom_call.1} parent=1 // pred_check_branch
      %50 = sbr.rel (0) target = $region17
    $region16: #{tpu_custom_call.1} parent=1 // pred_region
      _
    $region17: #{tpu_custom_call.1} parent=1 // pred_fallthru
      _
    // Predicated region
    $region18: #{tpu_custom_call.1} parent=1 // pred_check
      _
    $region19: #{tpu_custom_call.1} parent=1 // pred_check_branch
      %52 = sbr.rel (0) target = $region21
    $region20: #{tpu_custom_call.1} parent=1 // pred_region
      %s54 = ssub.s32 128, 128
      %55 = vsyncadd [#allocation9], %s54
      %s57 = sshll.u32 [#allocation8], 4
      %s58 = int_to_ptr.vmem [resolvable:$true] %s57
      %60 = dma.hbm_to_vmem [thread:$0]  %s4, 128, %s58, [#allocation9]
    $region21: #{tpu_custom_call.1} parent=1 // pred_fallthru
      _
    // Predicated region
    $region22: #{tpu_custom_call.1} parent=1 // pred_check
      _
    $region23: #{tpu_custom_call.1} parent=1 // pred_check_branch
      %62 = sbr.rel (0) target = $region25
    $region24: #{tpu_custom_call.1} parent=1 // pred_region
      %s64 = ssub.s32 128, 128
      %65 = vsyncadd [#allocation9], %s64
      %s67 = sshll.u32 [#allocation10], 4
      %s68 = int_to_ptr.vmem [resolvable:$true] %s67
      %70 = dma.hbm_to_vmem [thread:$0]  %s5, 128, %s68, [#allocation9]
    $region25: #{tpu_custom_call.1} parent=1 // pred_fallthru
      _
    // Predicated region
    $region26: #{tpu_custom_call.1} parent=1 // pred_check
      _
    $region27: #{tpu_custom_call.1} parent=1 // pred_check_branch
      %72 = sbr.rel (0) target = $region29
    $region28: #{tpu_custom_call.1} parent=1 // pred_region
      %s74 = ssub.s32 16, 16
      %75 = vsyncadd [#allocation12], %s74
      %s77 = sshll.u32 [#allocation11], 4
      %s78 = int_to_ptr.vmem [resolvable:$true] %s77
      %80 = dma.hbm_to_vmem [thread:$0]  %s6, 16, %s78, [#allocation12]
    $region29: #{tpu_custom_call.1} parent=1 // pred_fallthru
      _
    // Predicated region
    $region30: #{tpu_custom_call.1} parent=1 // pred_check
      _
    $region31: #{tpu_custom_call.1} parent=1 // pred_check_branch
      %82 = sbr.rel (0) target = $region33
    $region32: #{tpu_custom_call.1} parent=1 // pred_region
      %83 = dma.done [#allocation3], 128
    $region33: #{tpu_custom_call.1} parent=1 // pred_fallthru
      _
    // Predicated region
    $region34: #{tpu_custom_call.1} parent=1 // pred_check
      _
    $region35: #{tpu_custom_call.1} parent=1 // pred_check_branch
      %85 = sbr.rel (0) target = $region37
    $region36: #{tpu_custom_call.1} parent=1 // pred_region
      %86 = dma.done [#allocation6], 40960
    $region37: #{tpu_custom_call.1} parent=1 // pred_fallthru
      _
    // Predicated region
    $region38: #{tpu_custom_call.1} parent=1 // pred_check
      _
    $region39: #{tpu_custom_call.1} parent=1 // pred_check_branch
      %88 = sbr.rel (0) target = $region41
    $region40: #{tpu_custom_call.1} parent=1 // pred_region
      %89 = dma.done [#allocation6], 80
    $region41: #{tpu_custom_call.1} parent=1 // pred_fallthru
      _
    // Predicated region
    $region42: #{tpu_custom_call.1} parent=1 // pred_check
      _
    $region43: #{tpu_custom_call.1} parent=1 // pred_check_branch
      %91 = sbr.rel (0) target = $region45
    $region44: #{tpu_custom_call.1} parent=1 // pred_region
      %92 = dma.done [#allocation9], 128
    $region45: #{tpu_custom_call.1} parent=1 // pred_fallthru
      _
    // Predicated region
    $region46: #{tpu_custom_call.1} parent=1 // pred_check
      _
    $region47: #{tpu_custom_call.1} parent=1 // pred_check_branch
      %94 = sbr.rel (0) target = $region49
    $region48: #{tpu_custom_call.1} parent=1 // pred_region
      %95 = dma.done [#allocation9], 128
    $region49: #{tpu_custom_call.1} parent=1 // pred_fallthru
      _
    // Predicated region
    $region50: #{tpu_custom_call.1} parent=1 // pred_check
      _
    $region51: #{tpu_custom_call.1} parent=1 // pred_check_branch
      %97 = sbr.rel (0) target = $region53
    $region52: #{tpu_custom_call.1} parent=1 // pred_region
      %98 = dma.done [#allocation12], 16
    $region53: #{tpu_custom_call.1} parent=1 // pred_fallthru
      _
    %v99 = vld [vmem:[#allocation2] sm:$0xff]
    %v100 = vld [vmem:[#allocation5] sm:$0xff]
    %v101 = vld [vmem:[#allocation5 + $0x8] sm:$0xff]
    %v102 = vld [vmem:[#allocation5 + $0x10] sm:$0xff]
    %v103 = vld [vmem:[#allocation5 + $0x18] sm:$0xff]
    %v104 = vld [vmem:[#allocation5 + $0x20] sm:$0xff]
    %v105 = vld [vmem:[#allocation5 + $0x28] sm:$0xff]
    %v106 = vld [vmem:[#allocation5 + $0x30] sm:$0xff]
    %v107 = vld [vmem:[#allocation5 + $0x38] sm:$0xff]
    %v108 = vld [vmem:[#allocation5 + $0x40] sm:$0xff]
    %v109 = vld [vmem:[#allocation5 + $0x48] sm:$0xff]
    %v110 = vld [vmem:[#allocation5 + $0x50] sm:$0xff]
    %v111 = vld [vmem:[#allocation5 + $0x58] sm:$0xff]
    %v112 = vld [vmem:[#allocation5 + $0x60] sm:$0xff]
    %v113 = vld [vmem:[#allocation5 + $0x68] sm:$0xff]
    %v114 = vld [vmem:[#allocation5 + $0x70] sm:$0xff]
    %v115 = vld [vmem:[#allocation5 + $0x78] sm:$0xff]
    %v116 = vld [vmem:[#allocation5 + $0x80] sm:$0xff]
    %v117 = vld [vmem:[#allocation5 + $0x88] sm:$0xff]
    %v118 = vld [vmem:[#allocation5 + $0x90] sm:$0xff]
    %v119 = vld [vmem:[#allocation5 + $0x98] sm:$0xff]
    %v120 = vld [vmem:[#allocation5 + $0xa0] sm:$0xff]
    %v121 = vld [vmem:[#allocation5 + $0xa8] sm:$0xff]
    %v122 = vld [vmem:[#allocation5 + $0xb0] sm:$0xff]
    %v123 = vld [vmem:[#allocation5 + $0xb8] sm:$0xff]
    %v124 = vld [vmem:[#allocation5 + $0xc0] sm:$0xff]
    %v125 = vld [vmem:[#allocation5 + $0xc8] sm:$0xff]
    %v126 = vld [vmem:[#allocation5 + $0xd0] sm:$0xff]
    %v127 = vld [vmem:[#allocation5 + $0xd8] sm:$0xff]
    %v128 = vld [vmem:[#allocation5 + $0xe0] sm:$0xff]
    %v129 = vld [vmem:[#allocation5 + $0xe8] sm:$0xff]
    %v130 = vld [vmem:[#allocation5 + $0xf0] sm:$0xff]
    %v131 = vld [vmem:[#allocation5 + $0xf8] sm:$0xff]
    %v132 = vld [vmem:[#allocation5 + $0x100] sm:$0xff]
    %v133 = vld [vmem:[#allocation5 + $0x108] sm:$0xff]
    %v134 = vld [vmem:[#allocation5 + $0x110] sm:$0xff]
    %v135 = vld [vmem:[#allocation5 + $0x118] sm:$0xff]
    %v136 = vld [vmem:[#allocation5 + $0x120] sm:$0xff]
    %v137 = vld [vmem:[#allocation5 + $0x128] sm:$0xff]
    %v138 = vld [vmem:[#allocation5 + $0x130] sm:$0xff]
    %v139 = vld [vmem:[#allocation5 + $0x138] sm:$0xff]
    %v140 = vld [vmem:[#allocation5 + $0x140] sm:$0xff]
    %v141 = vld [vmem:[#allocation5 + $0x148] sm:$0xff]
    %v142 = vld [vmem:[#allocation5 + $0x150] sm:$0xff]
    %v143 = vld [vmem:[#allocation5 + $0x158] sm:$0xff]
    %v144 = vld [vmem:[#allocation5 + $0x160] sm:$0xff]
    %v145 = vld [vmem:[#allocation5 + $0x168] sm:$0xff]
    %v146 = vld [vmem:[#allocation5 + $0x170] sm:$0xff]
    %v147 = vld [vmem:[#allocation5 + $0x178] sm:$0xff]
    %v148 = vld [vmem:[#allocation5 + $0x180] sm:$0xff]
    %v149 = vld [vmem:[#allocation5 + $0x188] sm:$0xff]
    %v150 = vld [vmem:[#allocation5 + $0x190] sm:$0xff]
    %v151 = vld [vmem:[#allocation5 + $0x198] sm:$0xff]
    %v152 = vld [vmem:[#allocation5 + $0x1a0] sm:$0xff]
    %v153 = vld [vmem:[#allocation5 + $0x1a8] sm:$0xff]
    %v154 = vld [vmem:[#allocation5 + $0x1b0] sm:$0xff]
    %v155 = vld [vmem:[#allocation5 + $0x1b8] sm:$0xff]
    %v156 = vld [vmem:[#allocation5 + $0x1c0] sm:$0xff]
    %v157 = vld [vmem:[#allocation5 + $0x1c8] sm:$0xff]
    %v158 = vld [vmem:[#allocation5 + $0x1d0] sm:$0xff]
    %v159 = vld [vmem:[#allocation5 + $0x1d8] sm:$0xff]
    %v160 = vld [vmem:[#allocation5 + $0x1e0] sm:$0xff]
    %v161 = vld [vmem:[#allocation5 + $0x1e8] sm:$0xff]
    %v162 = vld [vmem:[#allocation5 + $0x1f0] sm:$0xff]
    %v163 = vld [vmem:[#allocation5 + $0x1f8] sm:$0xff]
    %v164 = vld [vmem:[#allocation5 + $0x200] sm:$0xff]
    %v165 = vld [vmem:[#allocation5 + $0x208] sm:$0xff]
    %v166 = vld [vmem:[#allocation5 + $0x210] sm:$0xff]
    %v167 = vld [vmem:[#allocation5 + $0x218] sm:$0xff]
    %v168 = vld [vmem:[#allocation5 + $0x220] sm:$0xff]
    %v169 = vld [vmem:[#allocation5 + $0x228] sm:$0xff]
    %v170 = vld [vmem:[#allocation5 + $0x230] sm:$0xff]
    %v171 = vld [vmem:[#allocation5 + $0x238] sm:$0xff]
    %v172 = vld [vmem:[#allocation5 + $0x240] sm:$0xff]
    %v173 = vld [vmem:[#allocation5 + $0x248] sm:$0xff]
    %v174 = vld [vmem:[#allocation5 + $0x250] sm:$0xff]
    %v175 = vld [vmem:[#allocation5 + $0x258] sm:$0xff]
    %v176 = vld [vmem:[#allocation5 + $0x260] sm:$0xff]
    %v177 = vld [vmem:[#allocation5 + $0x268] sm:$0xff]
    %v178 = vld [vmem:[#allocation5 + $0x270] sm:$0xff]
    %v179 = vld [vmem:[#allocation5 + $0x278] sm:$0xff]
    %v180 = vld [vmem:[#allocation5 + $0x280] sm:$0xff]
    %v181 = vld [vmem:[#allocation5 + $0x288] sm:$0xff]
    %v182 = vld [vmem:[#allocation5 + $0x290] sm:$0xff]
    %v183 = vld [vmem:[#allocation5 + $0x298] sm:$0xff]
    %v184 = vld [vmem:[#allocation5 + $0x2a0] sm:$0xff]
    %v185 = vld [vmem:[#allocation5 + $0x2a8] sm:$0xff]
    %v186 = vld [vmem:[#allocation5 + $0x2b0] sm:$0xff]
    %v187 = vld [vmem:[#allocation5 + $0x2b8] sm:$0xff]
    %v188 = vld [vmem:[#allocation5 + $0x2c0] sm:$0xff]
    %v189 = vld [vmem:[#allocation5 + $0x2c8] sm:$0xff]
    %v190 = vld [vmem:[#allocation5 + $0x2d0] sm:$0xff]
    %v191 = vld [vmem:[#allocation5 + $0x2d8] sm:$0xff]
    %v192 = vld [vmem:[#allocation5 + $0x2e0] sm:$0xff]
    %v193 = vld [vmem:[#allocation5 + $0x2e8] sm:$0xff]
    %v194 = vld [vmem:[#allocation5 + $0x2f0] sm:$0xff]
    %v195 = vld [vmem:[#allocation5 + $0x2f8] sm:$0xff]
    %v196 = vld [vmem:[#allocation5 + $0x300] sm:$0xff]
    %v197 = vld [vmem:[#allocation5 + $0x308] sm:$0xff]
    %v198 = vld [vmem:[#allocation5 + $0x310] sm:$0xff]
    %v199 = vld [vmem:[#allocation5 + $0x318] sm:$0xff]
    %v200 = vld [vmem:[#allocation5 + $0x320] sm:$0xff]
    %v201 = vld [vmem:[#allocation5 + $0x328] sm:$0xff]
    %v202 = vld [vmem:[#allocation5 + $0x330] sm:$0xff]
    %v203 = vld [vmem:[#allocation5 + $0x338] sm:$0xff]
    %v204 = vld [vmem:[#allocation5 + $0x340] sm:$0xff]
    %v205 = vld [vmem:[#allocation5 + $0x348] sm:$0xff]
    %v206 = vld [vmem:[#allocation5 + $0x350] sm:$0xff]
    %v207 = vld [vmem:[#allocation5 + $0x358] sm:$0xff]
    %v208 = vld [vmem:[#allocation5 + $0x360] sm:$0xff]
    %v209 = vld [vmem:[#allocation5 + $0x368] sm:$0xff]
    %v210 = vld [vmem:[#allocation5 + $0x370] sm:$0xff]
    %v211 = vld [vmem:[#allocation5 + $0x378] sm:$0xff]
    %v212 = vld [vmem:[#allocation5 + $0x380] sm:$0xff]
    %v213 = vld [vmem:[#allocation5 + $0x388] sm:$0xff]
    %v214 = vld [vmem:[#allocation5 + $0x390] sm:$0xff]
    %v215 = vld [vmem:[#allocation5 + $0x398] sm:$0xff]
    %v216 = vld [vmem:[#allocation5 + $0x3a0] sm:$0xff]
    %v217 = vld [vmem:[#allocation5 + $0x3a8] sm:$0xff]
    %v218 = vld [vmem:[#allocation5 + $0x3b0] sm:$0xff]
    %v219 = vld [vmem:[#allocation5 + $0x3b8] sm:$0xff]
    %v220 = vld [vmem:[#allocation5 + $0x3c0] sm:$0xff]
    %v221 = vld [vmem:[#allocation5 + $0x3c8] sm:$0xff]
    %v222 = vld [vmem:[#allocation5 + $0x3d0] sm:$0xff]
    %v223 = vld [vmem:[#allocation5 + $0x3d8] sm:$0xff]
    %v224 = vld [vmem:[#allocation5 + $0x3e0] sm:$0xff]
    %v225 = vld [vmem:[#allocation5 + $0x3e8] sm:$0xff]
    %v226 = vld [vmem:[#allocation5 + $0x3f0] sm:$0xff]
    %v227 = vld [vmem:[#allocation5 + $0x3f8] sm:$0xff]
    %v228 = vld [vmem:[#allocation5 + $0x400] sm:$0xff]
    %v229 = vld [vmem:[#allocation5 + $0x408] sm:$0xff]
    %v230 = vld [vmem:[#allocation5 + $0x410] sm:$0xff]
    %v231 = vld [vmem:[#allocation5 + $0x418] sm:$0xff]
    %v232 = vld [vmem:[#allocation5 + $0x420] sm:$0xff]
    %v233 = vld [vmem:[#allocation5 + $0x428] sm:$0xff]
    %v234 = vld [vmem:[#allocation5 + $0x430] sm:$0xff]
    %v235 = vld [vmem:[#allocation5 + $0x438] sm:$0xff]
    %v236 = vld [vmem:[#allocation5 + $0x440] sm:$0xff]
    %v237 = vld [vmem:[#allocation5 + $0x448] sm:$0xff]
    %v238 = vld [vmem:[#allocation5 + $0x450] sm:$0xff]
    %v239 = vld [vmem:[#allocation5 + $0x458] sm:$0xff]
    %v240 = vld [vmem:[#allocation5 + $0x460] sm:$0xff]
    %v241 = vld [vmem:[#allocation5 + $0x468] sm:$0xff]
    %v242 = vld [vmem:[#allocation5 + $0x470] sm:$0xff]
    %v243 = vld [vmem:[#allocation5 + $0x478] sm:$0xff]
    %v244 = vld [vmem:[#allocation5 + $0x480] sm:$0xff]
    %v245 = vld [vmem:[#allocation5 + $0x488] sm:$0xff]
    %v246 = vld [vmem:[#allocation5 + $0x490] sm:$0xff]
    %v247 = vld [vmem:[#allocation5 + $0x498] sm:$0xff]
    %v248 = vld [vmem:[#allocation5 + $0x4a0] sm:$0xff]
    %v249 = vld [vmem:[#allocation5 + $0x4a8] sm:$0xff]
    %v250 = vld [vmem:[#allocation5 + $0x4b0] sm:$0xff]
    %v251 = vld [vmem:[#allocation5 + $0x4b8] sm:$0xff]
    %v252 = vld [vmem:[#allocation5 + $0x4c0] sm:$0xff]
    %v253 = vld [vmem:[#allocation5 + $0x4c8] sm:$0xff]
    %v254 = vld [vmem:[#allocation5 + $0x4d0] sm:$0xff]
    %v255 = vld [vmem:[#allocation5 + $0x4d8] sm:$0xff]
    %v256 = vld [vmem:[#allocation5 + $0x4e0] sm:$0xff]
    %v257 = vld [vmem:[#allocation5 + $0x4e8] sm:$0xff]
    %v258 = vld [vmem:[#allocation5 + $0x4f0] sm:$0xff]
    %v259 = vld [vmem:[#allocation5 + $0x4f8] sm:$0xff]
    %v260 = vld [vmem:[#allocation5 + $0x500] sm:$0xff]
    %v261 = vld [vmem:[#allocation5 + $0x508] sm:$0xff]
    %v262 = vld [vmem:[#allocation5 + $0x510] sm:$0xff]
    %v263 = vld [vmem:[#allocation5 + $0x518] sm:$0xff]
    %v264 = vld [vmem:[#allocation5 + $0x520] sm:$0xff]
    %v265 = vld [vmem:[#allocation5 + $0x528] sm:$0xff]
    %v266 = vld [vmem:[#allocation5 + $0x530] sm:$0xff]
    %v267 = vld [vmem:[#allocation5 + $0x538] sm:$0xff]
    %v268 = vld [vmem:[#allocation5 + $0x540] sm:$0xff]
    %v269 = vld [vmem:[#allocation5 + $0x548] sm:$0xff]
    %v270 = vld [vmem:[#allocation5 + $0x550] sm:$0xff]
    %v271 = vld [vmem:[#allocation5 + $0x558] sm:$0xff]
    %v272 = vld [vmem:[#allocation5 + $0x560] sm:$0xff]
    %v273 = vld [vmem:[#allocation5 + $0x568] sm:$0xff]
    %v274 = vld [vmem:[#allocation5 + $0x570] sm:$0xff]
    %v275 = vld [vmem:[#allocation5 + $0x578] sm:$0xff]
    %v276 = vld [vmem:[#allocation5 + $0x580] sm:$0xff]
    %v277 = vld [vmem:[#allocation5 + $0x588] sm:$0xff]
    %v278 = vld [vmem:[#allocation5 + $0x590] sm:$0xff]
    %v279 = vld [vmem:[#allocation5 + $0x598] sm:$0xff]
    %v280 = vld [vmem:[#allocation5 + $0x5a0] sm:$0xff]
    %v281 = vld [vmem:[#allocation5 + $0x5a8] sm:$0xff]
    %v282 = vld [vmem:[#allocation5 + $0x5b0] sm:$0xff]
    %v283 = vld [vmem:[#allocation5 + $0x5b8] sm:$0xff]
    %v284 = vld [vmem:[#allocation5 + $0x5c0] sm:$0xff]
    %v285 = vld [vmem:[#allocation5 + $0x5c8] sm:$0xff]
    %v286 = vld [vmem:[#allocation5 + $0x5d0] sm:$0xff]
    %v287 = vld [vmem:[#allocation5 + $0x5d8] sm:$0xff]
    %v288 = vld [vmem:[#allocation5 + $0x5e0] sm:$0xff]
    %v289 = vld [vmem:[#allocation5 + $0x5e8] sm:$0xff]
    %v290 = vld [vmem:[#allocation5 + $0x5f0] sm:$0xff]
    %v291 = vld [vmem:[#allocation5 + $0x5f8] sm:$0xff]
    %v292 = vld [vmem:[#allocation5 + $0x600] sm:$0xff]
    %v293 = vld [vmem:[#allocation5 + $0x608] sm:$0xff]
    %v294 = vld [vmem:[#allocation5 + $0x610] sm:$0xff]
    %v295 = vld [vmem:[#allocation5 + $0x618] sm:$0xff]
    %v296 = vld [vmem:[#allocation5 + $0x620] sm:$0xff]
    %v297 = vld [vmem:[#allocation5 + $0x628] sm:$0xff]
    %v298 = vld [vmem:[#allocation5 + $0x630] sm:$0xff]
    %v299 = vld [vmem:[#allocation5 + $0x638] sm:$0xff]
    %v300 = vld [vmem:[#allocation5 + $0x640] sm:$0xff]
    %v301 = vld [vmem:[#allocation5 + $0x648] sm:$0xff]
    %v302 = vld [vmem:[#allocation5 + $0x650] sm:$0xff]
    %v303 = vld [vmem:[#allocation5 + $0x658] sm:$0xff]
    %v304 = vld [vmem:[#allocation5 + $0x660] sm:$0xff]
    %v305 = vld [vmem:[#allocation5 + $0x668] sm:$0xff]
    %v306 = vld [vmem:[#allocation5 + $0x670] sm:$0xff]
    %v307 = vld [vmem:[#allocation5 + $0x678] sm:$0xff]
    %v308 = vld [vmem:[#allocation5 + $0x680] sm:$0xff]
    %v309 = vld [vmem:[#allocation5 + $0x688] sm:$0xff]
    %v310 = vld [vmem:[#allocation5 + $0x690] sm:$0xff]
    %v311 = vld [vmem:[#allocation5 + $0x698] sm:$0xff]
    %v312 = vld [vmem:[#allocation5 + $0x6a0] sm:$0xff]
    %v313 = vld [vmem:[#allocation5 + $0x6a8] sm:$0xff]
    %v314 = vld [vmem:[#allocation5 + $0x6b0] sm:$0xff]
    %v315 = vld [vmem:[#allocation5 + $0x6b8] sm:$0xff]
    %v316 = vld [vmem:[#allocation5 + $0x6c0] sm:$0xff]
    %v317 = vld [vmem:[#allocation5 + $0x6c8] sm:$0xff]
    %v318 = vld [vmem:[#allocation5 + $0x6d0] sm:$0xff]
    %v319 = vld [vmem:[#allocation5 + $0x6d8] sm:$0xff]
    %v320 = vld [vmem:[#allocation5 + $0x6e0] sm:$0xff]
    %v321 = vld [vmem:[#allocation5 + $0x6e8] sm:$0xff]
    %v322 = vld [vmem:[#allocation5 + $0x6f0] sm:$0xff]
    %v323 = vld [vmem:[#allocation5 + $0x6f8] sm:$0xff]
    %v324 = vld [vmem:[#allocation5 + $0x700] sm:$0xff]
    %v325 = vld [vmem:[#allocation5 + $0x708] sm:$0xff]
    %v326 = vld [vmem:[#allocation5 + $0x710] sm:$0xff]
    %v327 = vld [vmem:[#allocation5 + $0x718] sm:$0xff]
    %v328 = vld [vmem:[#allocation5 + $0x720] sm:$0xff]
    %v329 = vld [vmem:[#allocation5 + $0x728] sm:$0xff]
    %v330 = vld [vmem:[#allocation5 + $0x730] sm:$0xff]
    %v331 = vld [vmem:[#allocation5 + $0x738] sm:$0xff]
    %v332 = vld [vmem:[#allocation5 + $0x740] sm:$0xff]
    %v333 = vld [vmem:[#allocation5 + $0x748] sm:$0xff]
    %v334 = vld [vmem:[#allocation5 + $0x750] sm:$0xff]
    %v335 = vld [vmem:[#allocation5 + $0x758] sm:$0xff]
    %v336 = vld [vmem:[#allocation5 + $0x760] sm:$0xff]
    %v337 = vld [vmem:[#allocation5 + $0x768] sm:$0xff]
    %v338 = vld [vmem:[#allocation5 + $0x770] sm:$0xff]
    %v339 = vld [vmem:[#allocation5 + $0x778] sm:$0xff]
    %v340 = vld [vmem:[#allocation5 + $0x780] sm:$0xff]
    %v341 = vld [vmem:[#allocation5 + $0x788] sm:$0xff]
    %v342 = vld [vmem:[#allocation5 + $0x790] sm:$0xff]
    %v343 = vld [vmem:[#allocation5 + $0x798] sm:$0xff]
    %v344 = vld [vmem:[#allocation5 + $0x7a0] sm:$0xff]
    %v345 = vld [vmem:[#allocation5 + $0x7a8] sm:$0xff]
    %v346 = vld [vmem:[#allocation5 + $0x7b0] sm:$0xff]
    %v347 = vld [vmem:[#allocation5 + $0x7b8] sm:$0xff]
    %v348 = vld [vmem:[#allocation5 + $0x7c0] sm:$0xff]
    %v349 = vld [vmem:[#allocation5 + $0x7c8] sm:$0xff]
    %v350 = vld [vmem:[#allocation5 + $0x7d0] sm:$0xff]
    %v351 = vld [vmem:[#allocation5 + $0x7d8] sm:$0xff]
    %v352 = vld [vmem:[#allocation5 + $0x7e0] sm:$0xff]
    %v353 = vld [vmem:[#allocation5 + $0x7e8] sm:$0xff]
    %v354 = vld [vmem:[#allocation5 + $0x7f0] sm:$0xff]
    %v355 = vld [vmem:[#allocation5 + $0x7f8] sm:$0xff]
    %v356 = vld [vmem:[#allocation5 + $0x800] sm:$0xff]
    %v357 = vld [vmem:[#allocation5 + $0x808] sm:$0xff]
    %v358 = vld [vmem:[#allocation5 + $0x810] sm:$0xff]
    %v359 = vld [vmem:[#allocation5 + $0x818] sm:$0xff]
    %v360 = vld [vmem:[#allocation5 + $0x820] sm:$0xff]
    %v361 = vld [vmem:[#allocation5 + $0x828] sm:$0xff]
    %v362 = vld [vmem:[#allocation5 + $0x830] sm:$0xff]
    %v363 = vld [vmem:[#allocation5 + $0x838] sm:$0xff]
    %v364 = vld [vmem:[#allocation5 + $0x840] sm:$0xff]
    %v365 = vld [vmem:[#allocation5 + $0x848] sm:$0xff]
    %v366 = vld [vmem:[#allocation5 + $0x850] sm:$0xff]
    %v367 = vld [vmem:[#allocation5 + $0x858] sm:$0xff]
    %v368 = vld [vmem:[#allocation5 + $0x860] sm:$0xff]
    %v369 = vld [vmem:[#allocation5 + $0x868] sm:$0xff]
    %v370 = vld [vmem:[#allocation5 + $0x870] sm:$0xff]
    %v371 = vld [vmem:[#allocation5 + $0x878] sm:$0xff]
    %v372 = vld [vmem:[#allocation5 + $0x880] sm:$0xff]
    %v373 = vld [vmem:[#allocation5 + $0x888] sm:$0xff]
    %v374 = vld [vmem:[#allocation5 + $0x890] sm:$0xff]
    %v375 = vld [vmem:[#allocation5 + $0x898] sm:$0xff]
    %v376 = vld [vmem:[#allocation5 + $0x8a0] sm:$0xff]
    %v377 = vld [vmem:[#allocation5 + $0x8a8] sm:$0xff]
    %v378 = vld [vmem:[#allocation5 + $0x8b0] sm:$0xff]
    %v379 = vld [vmem:[#allocation5 + $0x8b8] sm:$0xff]
    %v380 = vld [vmem:[#allocation5 + $0x8c0] sm:$0xff]
    %v381 = vld [vmem:[#allocation5 + $0x8c8] sm:$0xff]
    %v382 = vld [vmem:[#allocation5 + $0x8d0] sm:$0xff]
    %v383 = vld [vmem:[#allocation5 + $0x8d8] sm:$0xff]
    %v384 = vld [vmem:[#allocation5 + $0x8e0] sm:$0xff]
    %v385 = vld [vmem:[#allocation5 + $0x8e8] sm:$0xff]
    %v386 = vld [vmem:[#allocation5 + $0x8f0] sm:$0xff]
    %v387 = vld [vmem:[#allocation5 + $0x8f8] sm:$0xff]
    %v388 = vld [vmem:[#allocation5 + $0x900] sm:$0xff]
    %v389 = vld [vmem:[#allocation5 + $0x908] sm:$0xff]
    %v390 = vld [vmem:[#allocation5 + $0x910] sm:$0xff]
    %v391 = vld [vmem:[#allocation5 + $0x918] sm:$0xff]
    %v392 = vld [vmem:[#allocation5 + $0x920] sm:$0xff]
    %v393 = vld [vmem:[#allocation5 + $0x928] sm:$0xff]
    %v394 = vld [vmem:[#allocation5 + $0x930] sm:$0xff]
    %v395 = vld [vmem:[#allocation5 + $0x938] sm:$0xff]
    %v396 = vld [vmem:[#allocation5 + $0x940] sm:$0xff]
    %v397 = vld [vmem:[#allocation5 + $0x948] sm:$0xff]
    %v398 = vld [vmem:[#allocation5 + $0x950] sm:$0xff]
    %v399 = vld [vmem:[#allocation5 + $0x958] sm:$0xff]
    %v400 = vld [vmem:[#allocation5 + $0x960] sm:$0xff]
    %v401 = vld [vmem:[#allocation5 + $0x968] sm:$0xff]
    %v402 = vld [vmem:[#allocation5 + $0x970] sm:$0xff]
    %v403 = vld [vmem:[#allocation5 + $0x978] sm:$0xff]
    %v404 = vld [vmem:[#allocation5 + $0x980] sm:$0xff]
    %v405 = vld [vmem:[#allocation5 + $0x988] sm:$0xff]
    %v406 = vld [vmem:[#allocation5 + $0x990] sm:$0xff]
    %v407 = vld [vmem:[#allocation5 + $0x998] sm:$0xff]
    %v408 = vld [vmem:[#allocation5 + $0x9a0] sm:$0xff]
    %v409 = vld [vmem:[#allocation5 + $0x9a8] sm:$0xff]
    %v410 = vld [vmem:[#allocation5 + $0x9b0] sm:$0xff]
    %v411 = vld [vmem:[#allocation5 + $0x9b8] sm:$0xff]
    %v412 = vld [vmem:[#allocation5 + $0x9c0] sm:$0xff]
    %v413 = vld [vmem:[#allocation5 + $0x9c8] sm:$0xff]
    %v414 = vld [vmem:[#allocation5 + $0x9d0] sm:$0xff]
    %v415 = vld [vmem:[#allocation5 + $0x9d8] sm:$0xff]
    %v416 = vld [vmem:[#allocation5 + $0x9e0] sm:$0xff]
    %v417 = vld [vmem:[#allocation5 + $0x9e8] sm:$0xff]
    %v418 = vld [vmem:[#allocation5 + $0x9f0] sm:$0xff]
    %v419 = vld [vmem:[#allocation5 + $0x9f8] sm:$0xff]
    %v420 = vld [vmem:[#allocation7] sm:$0x1f]
    %v422 = vlaneseq
    %v423 = vshrl.u32 %v422, 7
    %v424 = vsub.s32 0, %v423
    %v425 = vrot.slane %v420, %v424
    %v426 = vlaneseq
    %v427 = vshrl.u32 %v426, 7
    %v428 = vsub.s32 1, %v427
    %v429 = vrot.slane %v420, %v428
    %v430 = vlaneseq
    %v431 = vshrl.u32 %v430, 7
    %v432 = vsub.s32 2, %v431
    %v433 = vrot.slane %v420, %v432
    %v434 = vlaneseq
    %v435 = vshrl.u32 %v434, 7
    %v436 = vsub.s32 3, %v435
    %v437 = vrot.slane %v420, %v436
    %v438 = vlaneseq
    %v439 = vshrl.u32 %v438, 7
    %v440 = vsub.s32 4, %v439
    %v441 = vrot.slane %v420, %v440
    %v448 = vcombine.high %v99, %v99
    %v450 = vunpack.c.l.s4 1983009808
    %v451 = vunpack.c.0.s8 %v450
    %v452 = vlaneseq
    %v453 = vshrl.u32 %v452, 7
    %v454 = vsub.s32 %v451, %v453
    %v455 = vrot.slane %v99, %v454
    %v457 = vunpack.c.l.s4 1983009808
    %v458 = vunpack.c.0.s8 %v457
    %v459 = vlaneseq
    %v460 = vshrl.u32 %v459, 7
    %v461 = vsub.s32 %v458, %v460
    %v462 = vrot.slane %v448, %v461
    %v463 = vcombine.high %v455, %v455
    %v464 = vcombine.high %v462, %v462
    %469 = vmatprep.subr.mxu0 %v176
    %470 = vmatpush1.msra.mxu0 %v175
    %471 = vmatprep.subr.mxu0 %v171
    %472 = vmatpush1.msra.mxu0 %v170
    %473 = vmatprep.subr.mxu0 %v166
    %474 = vmatpush1.msra.mxu0 %v165
    %475 = vmatprep.subr.mxu0 %v161
    %476 = vmatpush1.msra.mxu0 %v160
    %477 = vmatprep.subr.mxu0 %v156
    %478 = vmatpush1.msra.mxu0 %v155
    %479 = vmatprep.subr.mxu0 %v151
    %480 = vmatpush1.msra.mxu0 %v150
    %481 = vmatprep.subr.mxu0 %v146
    %482 = vmatpush1.msra.mxu0 %v145
    %483 = vmatprep.subr.mxu0 %v141
    %484 = vmatpush1.msra.mxu0 %v140
    %485 = vmatprep.subr.mxu0 %v136
    %486 = vmatpush1.msra.mxu0 %v135
    %487 = vmatprep.subr.mxu0 %v131
    %488 = vmatpush1.msra.mxu0 %v130
    %489 = vmatprep.subr.mxu0 %v126
    %490 = vmatpush1.msra.mxu0 %v125
    %491 = vmatprep.subr.mxu0 %v121
    %492 = vmatpush1.msra.mxu0 %v120
    %493 = vmatprep.subr.mxu0 %v116
    %494 = vmatpush1.msra.mxu0 %v115
    %495 = vmatprep.subr.mxu0 %v111
    %496 = vmatpush1.msra.mxu0 %v110
    %497 = vmatprep.subr.mxu0 %v106
    %498 = vmatpush1.msra.mxu0 %v105
    %499 = vmatprep.subr.mxu0 %v101
    %500 = vmatpush1.msra.mxu0 %v100
    %501 = vmatprep.subr.mxu0 %v256
    %502 = vmatpush2.msra.mxu0 %v255
    %503 = vmatprep.subr.mxu0 %v251
    %504 = vmatpush2.msra.mxu0 %v250
    %505 = vmatprep.subr.mxu0 %v246
    %506 = vmatpush2.msra.mxu0 %v245
    %507 = vmatprep.subr.mxu0 %v241
    %508 = vmatpush2.msra.mxu0 %v240
    %509 = vmatprep.subr.mxu0 %v236
    %510 = vmatpush2.msra.mxu0 %v235
    %511 = vmatprep.subr.mxu0 %v231
    %512 = vmatpush2.msra.mxu0 %v230
    %513 = vmatprep.subr.mxu0 %v226
    %514 = vmatpush2.msra.mxu0 %v225
    %515 = vmatprep.subr.mxu0 %v221
    %516 = vmatpush2.msra.mxu0 %v220
    %517 = vmatprep.subr.mxu0 %v216
    %518 = vmatpush2.msra.mxu0 %v215
    %519 = vmatprep.subr.mxu0 %v211
    %520 = vmatpush2.msra.mxu0 %v210
    %521 = vmatprep.subr.mxu0 %v206
    %522 = vmatpush2.msra.mxu0 %v205
    %523 = vmatprep.subr.mxu0 %v201
    %524 = vmatpush2.msra.mxu0 %v200
    %525 = vmatprep.subr.mxu0 %v196
    %526 = vmatpush2.msra.mxu0 %v195
    %527 = vmatprep.subr.mxu0 %v191
    %528 = vmatpush2.msra.mxu0 %v190
    %529 = vmatprep.subr.mxu0 %v186
    %530 = vmatpush2.msra.mxu0 %v185
    %531 = vmatprep.subr.mxu0 %v181
    %532 = vmatpush2.msra.mxu0 %v180
    %533 = vmatprep.mubr.f32.mxu0 %v463
    %534 = vmatmul.mubr.f32.gmra.mxu0 %v455
    %v535 = vpop.f32.mrf.mxu0
    %v536 = vadd.f32 %v425, %v535
    %v537 = vpop.f32.mrf.mxu0
    %v538 = vadd.f32 %v429, %v537
    %539 = vdwg.mxu0
    %540 = vmatprep.subr.mxu0 %v336
    %541 = vmatpush1.msra.mxu0 %v335
    %542 = vmatprep.subr.mxu0 %v331
    %543 = vmatpush1.msra.mxu0 %v330
    %544 = vmatprep.subr.mxu0 %v326
    %545 = vmatpush1.msra.mxu0 %v325
    %546 = vmatprep.subr.mxu0 %v321
    %547 = vmatpush1.msra.mxu0 %v320
    %548 = vmatprep.subr.mxu0 %v316
    %549 = vmatpush1.msra.mxu0 %v315
    %550 = vmatprep.subr.mxu0 %v311
    %551 = vmatpush1.msra.mxu0 %v310
    %552 = vmatprep.subr.mxu0 %v306
    %553 = vmatpush1.msra.mxu0 %v305
    %554 = vmatprep.subr.mxu0 %v301
    %555 = vmatpush1.msra.mxu0 %v300
    %556 = vmatprep.subr.mxu0 %v296
    %557 = vmatpush1.msra.mxu0 %v295
    %558 = vmatprep.subr.mxu0 %v291
    %559 = vmatpush1.msra.mxu0 %v290
    %560 = vmatprep.subr.mxu0 %v286
    %561 = vmatpush1.msra.mxu0 %v285
    %562 = vmatprep.subr.mxu0 %v281
    %563 = vmatpush1.msra.mxu0 %v280
    %564 = vmatprep.subr.mxu0 %v276
    %565 = vmatpush1.msra.mxu0 %v275
    %566 = vmatprep.subr.mxu0 %v271
    %567 = vmatpush1.msra.mxu0 %v270
    %568 = vmatprep.subr.mxu0 %v266
    %569 = vmatpush1.msra.mxu0 %v265
    %570 = vmatprep.subr.mxu0 %v261
    %571 = vmatpush1.msra.mxu0 %v260
    %572 = vmatprep.subr.mxu0 %v416
    %573 = vmatpush2.msra.mxu0 %v415
    %574 = vmatprep.subr.mxu0 %v411
    %575 = vmatpush2.msra.mxu0 %v410
    %576 = vmatprep.subr.mxu0 %v406
    %577 = vmatpush2.msra.mxu0 %v405
    %578 = vmatprep.subr.mxu0 %v401
    %579 = vmatpush2.msra.mxu0 %v400
    %580 = vmatprep.subr.mxu0 %v396
    %581 = vmatpush2.msra.mxu0 %v395
    %582 = vmatprep.subr.mxu0 %v391
    %583 = vmatpush2.msra.mxu0 %v390
    %584 = vmatprep.subr.mxu0 %v386
    %585 = vmatpush2.msra.mxu0 %v385
    %586 = vmatprep.subr.mxu0 %v381
    %587 = vmatpush2.msra.mxu0 %v380
    %588 = vmatprep.subr.mxu0 %v376
    %589 = vmatpush2.msra.mxu0 %v375
    %590 = vmatprep.subr.mxu0 %v371
    %591 = vmatpush2.msra.mxu0 %v370
    %592 = vmatprep.subr.mxu0 %v366
    %593 = vmatpush2.msra.mxu0 %v365
    %594 = vmatprep.subr.mxu0 %v361
    %595 = vmatpush2.msra.mxu0 %v360
    %596 = vmatprep.subr.mxu0 %v356
    %597 = vmatpush2.msra.mxu0 %v355
    %598 = vmatprep.subr.mxu0 %v351
    %599 = vmatpush2.msra.mxu0 %v350
    %600 = vmatprep.subr.mxu0 %v346
    %601 = vmatpush2.msra.mxu0 %v345
    %602 = vmatprep.subr.mxu0 %v341
    %603 = vmatpush2.msra.mxu0 %v340
    %604 = vmatprep.mubr.f32.mxu0 %v464
    %605 = vmatmul.mubr.f32.gmra.mxu0 %v462
    %v606 = vpop.f32.mrf.mxu0
    %v607 = vadd.f32 %v536, %v606
    %v608 = vpop.f32.mrf.mxu0
    %v609 = vadd.f32 %v538, %v608
    %610 = vdwg.mxu0
    %611 = vmatprep.subr.mxu0 %v178
    %612 = vmatpush1.msra.mxu0 %v177
    %613 = vmatprep.subr.mxu0 %v173
    %614 = vmatpush1.msra.mxu0 %v172
    %615 = vmatprep.subr.mxu0 %v168
    %616 = vmatpush1.msra.mxu0 %v167
    %617 = vmatprep.subr.mxu0 %v163
    %618 = vmatpush1.msra.mxu0 %v162
    %619 = vmatprep.subr.mxu0 %v158
    %620 = vmatpush1.msra.mxu0 %v157
    %621 = vmatprep.subr.mxu0 %v153
    %622 = vmatpush1.msra.mxu0 %v152
    %623 = vmatprep.subr.mxu0 %v148
    %624 = vmatpush1.msra.mxu0 %v147
    %625 = vmatprep.subr.mxu0 %v143
    %626 = vmatpush1.msra.mxu0 %v142
    %627 = vmatprep.subr.mxu0 %v138
    %628 = vmatpush1.msra.mxu0 %v137
    %629 = vmatprep.subr.mxu0 %v133
    %630 = vmatpush1.msra.mxu0 %v132
    %631 = vmatprep.subr.mxu0 %v128
    %632 = vmatpush1.msra.mxu0 %v127
    %633 = vmatprep.subr.mxu0 %v123
    %634 = vmatpush1.msra.mxu0 %v122
    %635 = vmatprep.subr.mxu0 %v118
    %636 = vmatpush1.msra.mxu0 %v117
    %637 = vmatprep.subr.mxu0 %v113
    %638 = vmatpush1.msra.mxu0 %v112
    %639 = vmatprep.subr.mxu0 %v108
    %640 = vmatpush1.msra.mxu0 %v107
    %641 = vmatprep.subr.mxu0 %v103
    %642 = vmatpush1.msra.mxu0 %v102
    %643 = vmatprep.subr.mxu0 %v258
    %644 = vmatpush2.msra.mxu0 %v257
    %645 = vmatprep.subr.mxu0 %v253
    %646 = vmatpush2.msra.mxu0 %v252
    %647 = vmatprep.subr.mxu0 %v248
    %648 = vmatpush2.msra.mxu0 %v247
    %649 = vmatprep.subr.mxu0 %v243
    %650 = vmatpush2.msra.mxu0 %v242
    %651 = vmatprep.subr.mxu0 %v238
    %652 = vmatpush2.msra.mxu0 %v237
    %653 = vmatprep.subr.mxu0 %v233
    %654 = vmatpush2.msra.mxu0 %v232
    %655 = vmatprep.subr.mxu0 %v228
    %656 = vmatpush2.msra.mxu0 %v227
    %657 = vmatprep.subr.mxu0 %v223
    %658 = vmatpush2.msra.mxu0 %v222
    %659 = vmatprep.subr.mxu0 %v218
    %660 = vmatpush2.msra.mxu0 %v217
    %661 = vmatprep.subr.mxu0 %v213
    %662 = vmatpush2.msra.mxu0 %v212
    %663 = vmatprep.subr.mxu0 %v208
    %664 = vmatpush2.msra.mxu0 %v207
    %665 = vmatprep.subr.mxu0 %v203
    %666 = vmatpush2.msra.mxu0 %v202
    %667 = vmatprep.subr.mxu0 %v198
    %668 = vmatpush2.msra.mxu0 %v197
    %669 = vmatprep.subr.mxu0 %v193
    %670 = vmatpush2.msra.mxu0 %v192
    %671 = vmatprep.subr.mxu0 %v188
    %672 = vmatpush2.msra.mxu0 %v187
    %673 = vmatprep.subr.mxu0 %v183
    %674 = vmatpush2.msra.mxu0 %v182
    %675 = vmatprep.mubr.f32.mxu0 %v463
    %676 = vmatmul.mubr.f32.gmra.mxu0 %v455
    %v677 = vpop.f32.mrf.mxu0
    %v678 = vadd.f32 %v433, %v677
    %v679 = vpop.f32.mrf.mxu0
    %v680 = vadd.f32 %v437, %v679
    %681 = vdwg.mxu0
    %682 = vmatprep.subr.mxu0 %v338
    %683 = vmatpush1.msra.mxu0 %v337
    %684 = vmatprep.subr.mxu0 %v333
    %685 = vmatpush1.msra.mxu0 %v332
    %686 = vmatprep.subr.mxu0 %v328
    %687 = vmatpush1.msra.mxu0 %v327
    %688 = vmatprep.subr.mxu0 %v323
    %689 = vmatpush1.msra.mxu0 %v322
    %690 = vmatprep.subr.mxu0 %v318
    %691 = vmatpush1.msra.mxu0 %v317
    %692 = vmatprep.subr.mxu0 %v313
    %693 = vmatpush1.msra.mxu0 %v312
    %694 = vmatprep.subr.mxu0 %v308
    %695 = vmatpush1.msra.mxu0 %v307
    %696 = vmatprep.subr.mxu0 %v303
    %697 = vmatpush1.msra.mxu0 %v302
    %698 = vmatprep.subr.mxu0 %v298
    %699 = vmatpush1.msra.mxu0 %v297
    %700 = vmatprep.subr.mxu0 %v293
    %701 = vmatpush1.msra.mxu0 %v292
    %702 = vmatprep.subr.mxu0 %v288
    %703 = vmatpush1.msra.mxu0 %v287
    %704 = vmatprep.subr.mxu0 %v283
    %705 = vmatpush1.msra.mxu0 %v282
    %706 = vmatprep.subr.mxu0 %v278
    %707 = vmatpush1.msra.mxu0 %v277
    %708 = vmatprep.subr.mxu0 %v273
    %709 = vmatpush1.msra.mxu0 %v272
    %710 = vmatprep.subr.mxu0 %v268
    %711 = vmatpush1.msra.mxu0 %v267
    %712 = vmatprep.subr.mxu0 %v263
    %713 = vmatpush1.msra.mxu0 %v262
    %714 = vmatprep.subr.mxu0 %v418
    %715 = vmatpush2.msra.mxu0 %v417
    %716 = vmatprep.subr.mxu0 %v413
    %717 = vmatpush2.msra.mxu0 %v412
    %718 = vmatprep.subr.mxu0 %v408
    %719 = vmatpush2.msra.mxu0 %v407
    %720 = vmatprep.subr.mxu0 %v403
    %721 = vmatpush2.msra.mxu0 %v402
    %722 = vmatprep.subr.mxu0 %v398
    %723 = vmatpush2.msra.mxu0 %v397
    %724 = vmatprep.subr.mxu0 %v393
    %725 = vmatpush2.msra.mxu0 %v392
    %726 = vmatprep.subr.mxu0 %v388
    %727 = vmatpush2.msra.mxu0 %v387
    %728 = vmatprep.subr.mxu0 %v383
    %729 = vmatpush2.msra.mxu0 %v382
    %730 = vmatprep.subr.mxu0 %v378
    %731 = vmatpush2.msra.mxu0 %v377
    %732 = vmatprep.subr.mxu0 %v373
    %733 = vmatpush2.msra.mxu0 %v372
    %734 = vmatprep.subr.mxu0 %v368
    %735 = vmatpush2.msra.mxu0 %v367
    %736 = vmatprep.subr.mxu0 %v363
    %737 = vmatpush2.msra.mxu0 %v362
    %738 = vmatprep.subr.mxu0 %v358
    %739 = vmatpush2.msra.mxu0 %v357
    %740 = vmatprep.subr.mxu0 %v353
    %741 = vmatpush2.msra.mxu0 %v352
    %742 = vmatprep.subr.mxu0 %v348
    %743 = vmatpush2.msra.mxu0 %v347
    %744 = vmatprep.subr.mxu0 %v343
    %745 = vmatpush2.msra.mxu0 %v342
    %746 = vmatprep.mubr.f32.mxu0 %v464
    %747 = vmatmul.mubr.f32.gmra.mxu0 %v462
    %v748 = vpop.f32.mrf.mxu0
    %v749 = vadd.f32 %v678, %v748
    %v750 = vpop.f32.mrf.mxu0
    %v751 = vadd.f32 %v680, %v750
    %752 = vdwg.mxu0
    %753 = vmatprep.subr.mxu0 0.0
    %754 = vmatpush1.msra.mxu0 %v179
    %755 = vmatprep.subr.mxu0 0.0
    %756 = vmatpush1.msra.mxu0 %v174
    %757 = vmatprep.subr.mxu0 0.0
    %758 = vmatpush1.msra.mxu0 %v169
    %759 = vmatprep.subr.mxu0 0.0
    %760 = vmatpush1.msra.mxu0 %v164
    %761 = vmatprep.subr.mxu0 0.0
    %762 = vmatpush1.msra.mxu0 %v159
    %763 = vmatprep.subr.mxu0 0.0
    %764 = vmatpush1.msra.mxu0 %v154
    %765 = vmatprep.subr.mxu0 0.0
    %766 = vmatpush1.msra.mxu0 %v149
    %767 = vmatprep.subr.mxu0 0.0
    %768 = vmatpush1.msra.mxu0 %v144
    %769 = vmatprep.subr.mxu0 0.0
    %770 = vmatpush1.msra.mxu0 %v139
    %771 = vmatprep.subr.mxu0 0.0
    %772 = vmatpush1.msra.mxu0 %v134
    %773 = vmatprep.subr.mxu0 0.0
    %774 = vmatpush1.msra.mxu0 %v129
    %775 = vmatprep.subr.mxu0 0.0
    %776 = vmatpush1.msra.mxu0 %v124
    %777 = vmatprep.subr.mxu0 0.0
    %778 = vmatpush1.msra.mxu0 %v119
    %779 = vmatprep.subr.mxu0 0.0
    %780 = vmatpush1.msra.mxu0 %v114
    %781 = vmatprep.subr.mxu0 0.0
    %782 = vmatpush1.msra.mxu0 %v109
    %783 = vmatprep.subr.mxu0 0.0
    %784 = vmatpush1.msra.mxu0 %v104
    %785 = vmatprep.subr.mxu0 0.0
    %786 = vmatpush2.msra.mxu0 %v259
    %787 = vmatprep.subr.mxu0 0.0
    %788 = vmatpush2.msra.mxu0 %v254
    %789 = vmatprep.subr.mxu0 0.0
    %790 = vmatpush2.msra.mxu0 %v249
    %791 = vmatprep.subr.mxu0 0.0
    %792 = vmatpush2.msra.mxu0 %v244
    %793 = vmatprep.subr.mxu0 0.0
    %794 = vmatpush2.msra.mxu0 %v239
    %795 = vmatprep.subr.mxu0 0.0
    %796 = vmatpush2.msra.mxu0 %v234
    %797 = vmatprep.subr.mxu0 0.0
    %798 = vmatpush2.msra.mxu0 %v229
    %799 = vmatprep.subr.mxu0 0.0
    %800 = vmatpush2.msra.mxu0 %v224
    %801 = vmatprep.subr.mxu0 0.0
    %802 = vmatpush2.msra.mxu0 %v219
    %803 = vmatprep.subr.mxu0 0.0
    %804 = vmatpush2.msra.mxu0 %v214
    %805 = vmatprep.subr.mxu0 0.0
    %806 = vmatpush2.msra.mxu0 %v209
    %807 = vmatprep.subr.mxu0 0.0
    %808 = vmatpush2.msra.mxu0 %v204
    %809 = vmatprep.subr.mxu0 0.0
    %810 = vmatpush2.msra.mxu0 %v199
    %811 = vmatprep.subr.mxu0 0.0
    %812 = vmatpush2.msra.mxu0 %v194
    %813 = vmatprep.subr.mxu0 0.0
    %814 = vmatpush2.msra.mxu0 %v189
    %815 = vmatprep.subr.mxu0 0.0
    %816 = vmatpush2.msra.mxu0 %v184
    %817 = vmatprep.mubr.f32.mxu0 %v463
    %818 = vmatmul.mubr.f32.gmra.mxu0 %v455
    %v819 = vpop.f32.mrf.mxu0
    %v820 = vadd.f32 %v441, %v819
    %v821 = vpop.f32.mrf.mxu0
    %822 = vdwg.mxu0
    %823 = vmatprep.subr.mxu0 0.0
    %824 = vmatpush1.msra.mxu0 %v339
    %825 = vmatprep.subr.mxu0 0.0
    %826 = vmatpush1.msra.mxu0 %v334
    %827 = vmatprep.subr.mxu0 0.0
    %828 = vmatpush1.msra.mxu0 %v329
    %829 = vmatprep.subr.mxu0 0.0
    %830 = vmatpush1.msra.mxu0 %v324
    %831 = vmatprep.subr.mxu0 0.0
    %832 = vmatpush1.msra.mxu0 %v319
    %833 = vmatprep.subr.mxu0 0.0
    %834 = vmatpush1.msra.mxu0 %v314
    %835 = vmatprep.subr.mxu0 0.0
    %836 = vmatpush1.msra.mxu0 %v309
    %837 = vmatprep.subr.mxu0 0.0
    %838 = vmatpush1.msra.mxu0 %v304
    %839 = vmatprep.subr.mxu0 0.0
    %840 = vmatpush1.msra.mxu0 %v299
    %841 = vmatprep.subr.mxu0 0.0
    %842 = vmatpush1.msra.mxu0 %v294
    %843 = vmatprep.subr.mxu0 0.0
    %844 = vmatpush1.msra.mxu0 %v289
    %845 = vmatprep.subr.mxu0 0.0
    %846 = vmatpush1.msra.mxu0 %v284
    %847 = vmatprep.subr.mxu0 0.0
    %848 = vmatpush1.msra.mxu0 %v279
    %849 = vmatprep.subr.mxu0 0.0
    %850 = vmatpush1.msra.mxu0 %v274
    %851 = vmatprep.subr.mxu0 0.0
    %852 = vmatpush1.msra.mxu0 %v269
    %853 = vmatprep.subr.mxu0 0.0
    %854 = vmatpush1.msra.mxu0 %v264
    %855 = vmatprep.subr.mxu0 0.0
    %856 = vmatpush2.msra.mxu0 %v419
    %857 = vmatprep.subr.mxu0 0.0
    %858 = vmatpush2.msra.mxu0 %v414
    %859 = vmatprep.subr.mxu0 0.0
    %860 = vmatpush2.msra.mxu0 %v409
    %861 = vmatprep.subr.mxu0 0.0
    %862 = vmatpush2.msra.mxu0 %v404
    %863 = vmatprep.subr.mxu0 0.0
    %864 = vmatpush2.msra.mxu0 %v399
    %865 = vmatprep.subr.mxu0 0.0
    %866 = vmatpush2.msra.mxu0 %v394
    %867 = vmatprep.subr.mxu0 0.0
    %868 = vmatpush2.msra.mxu0 %v389
    %869 = vmatprep.subr.mxu0 0.0
    %870 = vmatpush2.msra.mxu0 %v384
    %871 = vmatprep.subr.mxu0 0.0
    %872 = vmatpush2.msra.mxu0 %v379
    %873 = vmatprep.subr.mxu0 0.0
    %874 = vmatpush2.msra.mxu0 %v374
    %875 = vmatprep.subr.mxu0 0.0
    %876 = vmatpush2.msra.mxu0 %v369
    %877 = vmatprep.subr.mxu0 0.0
    %878 = vmatpush2.msra.mxu0 %v364
    %879 = vmatprep.subr.mxu0 0.0
    %880 = vmatpush2.msra.mxu0 %v359
    %881 = vmatprep.subr.mxu0 0.0
    %882 = vmatpush2.msra.mxu0 %v354
    %883 = vmatprep.subr.mxu0 0.0
    %884 = vmatpush2.msra.mxu0 %v349
    %885 = vmatprep.subr.mxu0 0.0
    %886 = vmatpush2.msra.mxu0 %v344
    %887 = vmatprep.mubr.f32.mxu0 %v464
    %888 = vmatmul.mubr.f32.gmra.mxu0 %v462
    %v889 = vpop.f32.mrf.mxu0
    %v890 = vadd.f32 %v820, %v889
    %v891 = vpop.f32.mrf.mxu0
    %892 = vdwg.mxu0
    %v893 = vmul.f32 %v607, 0.5
    %v894 = vmul.f32 %v609, 0.5
    %v895 = vmul.f32 %v749, 0.5
    %v896 = vmul.f32 %v751, 0.5
    %v897 = vmul.f32 %v890, 0.5
    %v898 = vmul.f32 %v607, 0.70710677
    %v899 = vmul.f32 %v609, 0.70710677
    %v900 = vmul.f32 %v749, 0.70710677
    %v901 = vmul.f32 %v751, 0.70710677
    %v902 = vmul.f32 %v890, 0.70710677
    %v903 = verf.f32.pop %v898
    %v904 = verf.f32.pop %v899
    %v905 = verf.f32.pop %v900
    %v906 = verf.f32.pop %v901
    %v907 = verf.f32.pop %v902
    %v908 = vadd.f32 %v903, 1.0
    %v909 = vadd.f32 %v904, 1.0
    %v910 = vadd.f32 %v905, 1.0
    %v911 = vadd.f32 %v906, 1.0
    %v912 = vadd.f32 %v907, 1.0
    %v913 = vmul.f32 %v893, %v908
    %v914 = vmul.f32 %v894, %v909
    %v915 = vmul.f32 %v895, %v910
    %v916 = vmul.f32 %v896, %v911
    %v917 = vmul.f32 %v897, %v912
    %v918 = vld [vmem:[%s3] sm:$0xff]
    %v919 = vld [vmem:[%s3 + $0x8] sm:$0xff]
    %v920 = vld [vmem:[%s3 + $0x10] sm:$0xff]
    %v921 = vld [vmem:[%s3 + $0x18] sm:$0xff]
    %v922 = vld [vmem:[%s3 + $0x20] sm:$0xff]
    %v923 = vld [vmem:[%s3 + $0x28] sm:$0xff]
    %v924 = vld [vmem:[%s3 + $0x30] sm:$0xff]
    %v925 = vld [vmem:[%s3 + $0x38] sm:$0xff]
    %v926 = vld [vmem:[%s3 + $0x40] sm:$0xff]
    %v927 = vld [vmem:[%s3 + $0x48] sm:$0xff]
    %v928 = vld [vmem:[%s3 + $0x50] sm:$0xff]
    %v929 = vld [vmem:[%s3 + $0x58] sm:$0xff]
    %v930 = vld [vmem:[%s3 + $0x60] sm:$0xff]
    %v931 = vld [vmem:[%s3 + $0x68] sm:$0xff]
    %v932 = vld [vmem:[%s3 + $0x70] sm:$0xff]
    %v933 = vld [vmem:[%s3 + $0x78] sm:$0xff]
    %v934 = vld [vmem:[#allocation8] sm:$0x1]
    %v935 = vlaneseq
    %v936 = vshrl.u32 %v935, 7
    %v937 = vsub.s32 0, %v936
    %v938 = vrot.slane %v934, %v937
    %939 = vmatprep.subr.mxu0 0.0
    %940 = vmatpush1.msra.mxu0 %v933
    %941 = vmatprep.subr.mxu0 0.0
    %942 = vmatpush1.msra.mxu0 %v932
    %943 = vmatprep.subr.mxu0 0.0
    %944 = vmatpush1.msra.mxu0 %v931
    %945 = vmatprep.subr.mxu0 0.0
    %946 = vmatpush1.msra.mxu0 %v930
    %947 = vmatprep.subr.mxu0 0.0
    %948 = vmatpush1.msra.mxu0 %v929
    %949 = vmatprep.subr.mxu0 0.0
    %950 = vmatpush1.msra.mxu0 %v928
    %951 = vmatprep.subr.mxu0 0.0
    %952 = vmatpush1.msra.mxu0 %v927
    %953 = vmatprep.subr.mxu0 0.0
    %954 = vmatpush1.msra.mxu0 %v926
    %955 = vmatprep.subr.mxu0 0.0
    %956 = vmatpush1.msra.mxu0 %v925
    %957 = vmatprep.subr.mxu0 0.0
    %958 = vmatpush1.msra.mxu0 %v924
    %959 = vmatprep.subr.mxu0 0.0
    %960 = vmatpush1.msra.mxu0 %v923
    %961 = vmatprep.subr.mxu0 0.0
    %962 = vmatpush1.msra.mxu0 %v922
    %963 = vmatprep.subr.mxu0 0.0
    %964 = vmatpush1.msra.mxu0 %v921
    %965 = vmatprep.subr.mxu0 0.0
    %966 = vmatpush1.msra.mxu0 %v920
    %967 = vmatprep.subr.mxu0 0.0
    %968 = vmatpush1.msra.mxu0 %v919
    %969 = vmatprep.subr.mxu0 0.0
    %970 = vmatpush1.msra.mxu0 %v918
    %971 = vmatprep.subr.mxu0 0.0
    %972 = vmatpush2.msra.mxu0 0.0
    %973 = vmatprep.subr.mxu0 0.0
    %974 = vmatpush2.msra.mxu0 0.0
    %975 = vmatprep.subr.mxu0 0.0
    %976 = vmatpush2.msra.mxu0 0.0
    %977 = vmatprep.subr.mxu0 0.0
    %978 = vmatpush2.msra.mxu0 0.0
    %979 = vmatprep.subr.mxu0 0.0
    %980 = vmatpush2.msra.mxu0 0.0
    %981 = vmatprep.subr.mxu0 0.0
    %982 = vmatpush2.msra.mxu0 0.0
    %983 = vmatprep.subr.mxu0 0.0
    %984 = vmatpush2.msra.mxu0 0.0
    %985 = vmatprep.subr.mxu0 0.0
    %986 = vmatpush2.msra.mxu0 0.0
    %987 = vmatprep.subr.mxu0 0.0
    %988 = vmatpush2.msra.mxu0 0.0
    %989 = vmatprep.subr.mxu0 0.0
    %990 = vmatpush2.msra.mxu0 0.0
    %991 = vmatprep.subr.mxu0 0.0
    %992 = vmatpush2.msra.mxu0 0.0
    %993 = vmatprep.subr.mxu0 0.0
    %994 = vmatpush2.msra.mxu0 0.0
    %995 = vmatprep.subr.mxu0 0.0
    %996 = vmatpush2.msra.mxu0 0.0
    %997 = vmatprep.subr.mxu0 0.0
    %998 = vmatpush2.msra.mxu0 0.0
    %999 = vmatprep.subr.mxu0 0.0
    %1000 = vmatpush2.msra.mxu0 0.0
    %1001 = vmatprep.subr.mxu0 0.0
    %1002 = vmatpush2.msra.mxu0 0.0
    %1003 = vmatprep.mubr.f32.mxu0 0.0
    %1004 = vmatmul.mubr.f32.gmra.mxu0 %v913
    %v1005 = vpop.f32.mrf.mxu0
    %v1006 = vadd.f32 %v938, %v1005
    %v1007 = vpop.f32.mrf.mxu0
    %1008 = vdwg.mxu0
    %v1009 = vmul.f32 %v1006, 0.5
    %v1010 = vmul.f32 %v1006, 0.70710677
    %v1011 = verf.f32.pop %v1010
    %v1012 = vadd.f32 %v1011, 1.0
    %v1013 = vmul.f32 %v1009, %v1012
    %v1014 = vld [vmem:[#allocation10] sm:$0x1]
    %v1015 = vlaneseq
    %v1016 = vshrl.u32 %v1015, 7
    %v1017 = vsub.s32 0, %v1016
    %v1018 = vrot.slane %v1014, %v1017
    %v1019 = vmul.f32 %v1013, %v1018
    %vm1020 = vcmask 517120
    %v1021 = vsel %vm1020, %v1019, 0.0
    %1022 = vadd.xlane.f32.xlu0 %v1021
    %v1023 = vpop.xlane.xlu0 %1022
    %s1024 = scalar_lea.vmem %s3, 128
    %v1025 = vld [vmem:[%s1024] sm:$0xff]
    %v1026 = vld [vmem:[%s1024 + $0x8] sm:$0xff]
    %v1027 = vld [vmem:[%s1024 + $0x10] sm:$0xff]
    %v1028 = vld [vmem:[%s1024 + $0x18] sm:$0xff]
    %v1029 = vld [vmem:[%s1024 + $0x20] sm:$0xff]
    %v1030 = vld [vmem:[%s1024 + $0x28] sm:$0xff]
    %v1031 = vld [vmem:[%s1024 + $0x30] sm:$0xff]
    %v1032 = vld [vmem:[%s1024 + $0x38] sm:$0xff]
    %v1033 = vld [vmem:[%s1024 + $0x40] sm:$0xff]
    %v1034 = vld [vmem:[%s1024 + $0x48] sm:$0xff]
    %v1035 = vld [vmem:[%s1024 + $0x50] sm:$0xff]
    %v1036 = vld [vmem:[%s1024 + $0x58] sm:$0xff]
    %v1037 = vld [vmem:[%s1024 + $0x60] sm:$0xff]
    %v1038 = vld [vmem:[%s1024 + $0x68] sm:$0xff]
    %v1039 = vld [vmem:[%s1024 + $0x70] sm:$0xff]
    %v1040 = vld [vmem:[%s1024 + $0x78] sm:$0xff]
    %v1041 = vld [vmem:[#allocation8 + $0x1] sm:$0x1]
    %v1042 = vlaneseq
    %v1043 = vshrl.u32 %v1042, 7
    %v1044 = vsub.s32 0, %v1043
    %v1045 = vrot.slane %v1041, %v1044
    %1046 = vmatprep.subr.mxu0 0.0
    %1047 = vmatpush1.msra.mxu0 %v1040
    %1048 = vmatprep.subr.mxu0 0.0
    %1049 = vmatpush1.msra.mxu0 %v1039
    %1050 = vmatprep.subr.mxu0 0.0
    %1051 = vmatpush1.msra.mxu0 %v1038
    %1052 = vmatprep.subr.mxu0 0.0
    %1053 = vmatpush1.msra.mxu0 %v1037
    %1054 = vmatprep.subr.mxu0 0.0
    %1055 = vmatpush1.msra.mxu0 %v1036
    %1056 = vmatprep.subr.mxu0 0.0
    %1057 = vmatpush1.msra.mxu0 %v1035
    %1058 = vmatprep.subr.mxu0 0.0
    %1059 = vmatpush1.msra.mxu0 %v1034
    %1060 = vmatprep.subr.mxu0 0.0
    %1061 = vmatpush1.msra.mxu0 %v1033
    %1062 = vmatprep.subr.mxu0 0.0
    %1063 = vmatpush1.msra.mxu0 %v1032
    %1064 = vmatprep.subr.mxu0 0.0
    %1065 = vmatpush1.msra.mxu0 %v1031
    %1066 = vmatprep.subr.mxu0 0.0
    %1067 = vmatpush1.msra.mxu0 %v1030
    %1068 = vmatprep.subr.mxu0 0.0
    %1069 = vmatpush1.msra.mxu0 %v1029
    %1070 = vmatprep.subr.mxu0 0.0
    %1071 = vmatpush1.msra.mxu0 %v1028
    %1072 = vmatprep.subr.mxu0 0.0
    %1073 = vmatpush1.msra.mxu0 %v1027
    %1074 = vmatprep.subr.mxu0 0.0
    %1075 = vmatpush1.msra.mxu0 %v1026
    %1076 = vmatprep.subr.mxu0 0.0
    %1077 = vmatpush1.msra.mxu0 %v1025
    %1078 = vmatprep.subr.mxu0 0.0
    %1079 = vmatpush2.msra.mxu0 0.0
    %1080 = vmatprep.subr.mxu0 0.0
    %1081 = vmatpush2.msra.mxu0 0.0
    %1082 = vmatprep.subr.mxu0 0.0
    %1083 = vmatpush2.msra.mxu0 0.0
    %1084 = vmatprep.subr.mxu0 0.0
    %1085 = vmatpush2.msra.mxu0 0.0
    %1086 = vmatprep.subr.mxu0 0.0
    %1087 = vmatpush2.msra.mxu0 0.0
    %1088 = vmatprep.subr.mxu0 0.0
    %1089 = vmatpush2.msra.mxu0 0.0
    %1090 = vmatprep.subr.mxu0 0.0
    %1091 = vmatpush2.msra.mxu0 0.0
    %1092 = vmatprep.subr.mxu0 0.0
    %1093 = vmatpush2.msra.mxu0 0.0
    %1094 = vmatprep.subr.mxu0 0.0
    %1095 = vmatpush2.msra.mxu0 0.0
    %1096 = vmatprep.subr.mxu0 0.0
    %1097 = vmatpush2.msra.mxu0 0.0
    %1098 = vmatprep.subr.mxu0 0.0
    %1099 = vmatpush2.msra.mxu0 0.0
    %1100 = vmatprep.subr.mxu0 0.0
    %1101 = vmatpush2.msra.mxu0 0.0
    %1102 = vmatprep.subr.mxu0 0.0
    %1103 = vmatpush2.msra.mxu0 0.0
    %1104 = vmatprep.subr.mxu0 0.0
    %1105 = vmatpush2.msra.mxu0 0.0
    %1106 = vmatprep.subr.mxu0 0.0
    %1107 = vmatpush2.msra.mxu0 0.0
    %1108 = vmatprep.subr.mxu0 0.0
    %1109 = vmatpush2.msra.mxu0 0.0
    %1110 = vmatprep.mubr.f32.mxu0 0.0
    %1111 = vmatmul.mubr.f32.gmra.mxu0 %v914
    %v1112 = vpop.f32.mrf.mxu0
    %v1113 = vadd.f32 %v1045, %v1112
    %v1114 = vpop.f32.mrf.mxu0
    %1115 = vdwg.mxu0
    %v1116 = vmul.f32 %v1113, 0.5
    %v1117 = vmul.f32 %v1113, 0.70710677
    %v1118 = verf.f32.pop %v1117
    %v1119 = vadd.f32 %v1118, 1.0
    %v1120 = vmul.f32 %v1116, %v1119
    %v1121 = vld [vmem:[#allocation10 + $0x1] sm:$0x1]
    %v1122 = vlaneseq
    %v1123 = vshrl.u32 %v1122, 7
    %v1124 = vsub.s32 0, %v1123
    %v1125 = vrot.slane %v1121, %v1124
    %v1126 = vmul.f32 %v1120, %v1125
    %v1127 = vsel %vm1020, %v1126, 0.0
    %1128 = vadd.xlane.f32.xlu0 %v1127
    %v1129 = vpop.xlane.xlu0 %1128
    %s1130 = scalar_lea.vmem %s3, 256
    %v1131 = vld [vmem:[%s1130] sm:$0xff]
    %v1132 = vld [vmem:[%s1130 + $0x8] sm:$0xff]
    %v1133 = vld [vmem:[%s1130 + $0x10] sm:$0xff]
    %v1134 = vld [vmem:[%s1130 + $0x18] sm:$0xff]
    %v1135 = vld [vmem:[%s1130 + $0x20] sm:$0xff]
    %v1136 = vld [vmem:[%s1130 + $0x28] sm:$0xff]
    %v1137 = vld [vmem:[%s1130 + $0x30] sm:$0xff]
    %v1138 = vld [vmem:[%s1130 + $0x38] sm:$0xff]
    %v1139 = vld [vmem:[%s1130 + $0x40] sm:$0xff]
    %v1140 = vld [vmem:[%s1130 + $0x48] sm:$0xff]
    %v1141 = vld [vmem:[%s1130 + $0x50] sm:$0xff]
    %v1142 = vld [vmem:[%s1130 + $0x58] sm:$0xff]
    %v1143 = vld [vmem:[%s1130 + $0x60] sm:$0xff]
    %v1144 = vld [vmem:[%s1130 + $0x68] sm:$0xff]
    %v1145 = vld [vmem:[%s1130 + $0x70] sm:$0xff]
    %v1146 = vld [vmem:[%s1130 + $0x78] sm:$0xff]
    %v1147 = vld [vmem:[#allocation8 + $0x2] sm:$0x1]
    %v1148 = vlaneseq
    %v1149 = vshrl.u32 %v1148, 7
    %v1150 = vsub.s32 0, %v1149
    %v1151 = vrot.slane %v1147, %v1150
    %1152 = vmatprep.subr.mxu0 0.0
    %1153 = vmatpush1.msra.mxu0 %v1146
    %1154 = vmatprep.subr.mxu0 0.0
    %1155 = vmatpush1.msra.mxu0 %v1145
    %1156 = vmatprep.subr.mxu0 0.0
    %1157 = vmatpush1.msra.mxu0 %v1144
    %1158 = vmatprep.subr.mxu0 0.0
    %1159 = vmatpush1.msra.mxu0 %v1143
    %1160 = vmatprep.subr.mxu0 0.0
    %1161 = vmatpush1.msra.mxu0 %v1142
    %1162 = vmatprep.subr.mxu0 0.0
    %1163 = vmatpush1.msra.mxu0 %v1141
    %1164 = vmatprep.subr.mxu0 0.0
    %1165 = vmatpush1.msra.mxu0 %v1140
    %1166 = vmatprep.subr.mxu0 0.0
    %1167 = vmatpush1.msra.mxu0 %v1139
    %1168 = vmatprep.subr.mxu0 0.0
    %1169 = vmatpush1.msra.mxu0 %v1138
    %1170 = vmatprep.subr.mxu0 0.0
    %1171 = vmatpush1.msra.mxu0 %v1137
    %1172 = vmatprep.subr.mxu0 0.0
    %1173 = vmatpush1.msra.mxu0 %v1136
    %1174 = vmatprep.subr.mxu0 0.0
    %1175 = vmatpush1.msra.mxu0 %v1135
    %1176 = vmatprep.subr.mxu0 0.0
    %1177 = vmatpush1.msra.mxu0 %v1134
    %1178 = vmatprep.subr.mxu0 0.0
    %1179 = vmatpush1.msra.mxu0 %v1133
    %1180 = vmatprep.subr.mxu0 0.0
    %1181 = vmatpush1.msra.mxu0 %v1132
    %1182 = vmatprep.subr.mxu0 0.0
    %1183 = vmatpush1.msra.mxu0 %v1131
    %1184 = vmatprep.subr.mxu0 0.0
    %1185 = vmatpush2.msra.mxu0 0.0
    %1186 = vmatprep.subr.mxu0 0.0
    %1187 = vmatpush2.msra.mxu0 0.0
    %1188 = vmatprep.subr.mxu0 0.0
    %1189 = vmatpush2.msra.mxu0 0.0
    %1190 = vmatprep.subr.mxu0 0.0
    %1191 = vmatpush2.msra.mxu0 0.0
    %1192 = vmatprep.subr.mxu0 0.0
    %1193 = vmatpush2.msra.mxu0 0.0
    %1194 = vmatprep.subr.mxu0 0.0
    %1195 = vmatpush2.msra.mxu0 0.0
    %1196 = vmatprep.subr.mxu0 0.0
    %1197 = vmatpush2.msra.mxu0 0.0
    %1198 = vmatprep.subr.mxu0 0.0
    %1199 = vmatpush2.msra.mxu0 0.0
    %1200 = vmatprep.subr.mxu0 0.0
    %1201 = vmatpush2.msra.mxu0 0.0
    %1202 = vmatprep.subr.mxu0 0.0
    %1203 = vmatpush2.msra.mxu0 0.0
    %1204 = vmatprep.subr.mxu0 0.0
    %1205 = vmatpush2.msra.mxu0 0.0
    %1206 = vmatprep.subr.mxu0 0.0
    %1207 = vmatpush2.msra.mxu0 0.0
    %1208 = vmatprep.subr.mxu0 0.0
    %1209 = vmatpush2.msra.mxu0 0.0
    %1210 = vmatprep.subr.mxu0 0.0
    %1211 = vmatpush2.msra.mxu0 0.0
    %1212 = vmatprep.subr.mxu0 0.0
    %1213 = vmatpush2.msra.mxu0 0.0
    %1214 = vmatprep.subr.mxu0 0.0
    %1215 = vmatpush2.msra.mxu0 0.0
    %1216 = vmatprep.mubr.f32.mxu0 0.0
    %1217 = vmatmul.mubr.f32.gmra.mxu0 %v915
    %v1218 = vpop.f32.mrf.mxu0
    %v1219 = vadd.f32 %v1151, %v1218
    %v1220 = vpop.f32.mrf.mxu0
    %1221 = vdwg.mxu0
    %v1222 = vmul.f32 %v1219, 0.5
    %v1223 = vmul.f32 %v1219, 0.70710677
    %v1224 = verf.f32.pop %v1223
    %v1225 = vadd.f32 %v1224, 1.0
    %v1226 = vmul.f32 %v1222, %v1225
    %v1227 = vld [vmem:[#allocation10 + $0x2] sm:$0x1]
    %v1228 = vlaneseq
    %v1229 = vshrl.u32 %v1228, 7
    %v1230 = vsub.s32 0, %v1229
    %v1231 = vrot.slane %v1227, %v1230
    %v1232 = vmul.f32 %v1226, %v1231
    %v1233 = vsel %vm1020, %v1232, 0.0
    %1234 = vadd.xlane.f32.xlu0 %v1233
    %v1235 = vpop.xlane.xlu0 %1234
    %s1236 = scalar_lea.vmem %s3, 384
    %v1237 = vld [vmem:[%s1236] sm:$0xff]
    %v1238 = vld [vmem:[%s1236 + $0x8] sm:$0xff]
    %v1239 = vld [vmem:[%s1236 + $0x10] sm:$0xff]
    %v1240 = vld [vmem:[%s1236 + $0x18] sm:$0xff]
    %v1241 = vld [vmem:[%s1236 + $0x20] sm:$0xff]
    %v1242 = vld [vmem:[%s1236 + $0x28] sm:$0xff]
    %v1243 = vld [vmem:[%s1236 + $0x30] sm:$0xff]
    %v1244 = vld [vmem:[%s1236 + $0x38] sm:$0xff]
    %v1245 = vld [vmem:[%s1236 + $0x40] sm:$0xff]
    %v1246 = vld [vmem:[%s1236 + $0x48] sm:$0xff]
    %v1247 = vld [vmem:[%s1236 + $0x50] sm:$0xff]
    %v1248 = vld [vmem:[%s1236 + $0x58] sm:$0xff]
    %v1249 = vld [vmem:[%s1236 + $0x60] sm:$0xff]
    %v1250 = vld [vmem:[%s1236 + $0x68] sm:$0xff]
    %v1251 = vld [vmem:[%s1236 + $0x70] sm:$0xff]
    %v1252 = vld [vmem:[%s1236 + $0x78] sm:$0xff]
    %v1253 = vld [vmem:[#allocation8 + $0x3] sm:$0x1]
    %v1254 = vlaneseq
    %v1255 = vshrl.u32 %v1254, 7
    %v1256 = vsub.s32 0, %v1255
    %v1257 = vrot.slane %v1253, %v1256
    %1258 = vmatprep.subr.mxu0 0.0
    %1259 = vmatpush1.msra.mxu0 %v1252
    %1260 = vmatprep.subr.mxu0 0.0
    %1261 = vmatpush1.msra.mxu0 %v1251
    %1262 = vmatprep.subr.mxu0 0.0
    %1263 = vmatpush1.msra.mxu0 %v1250
    %1264 = vmatprep.subr.mxu0 0.0
    %1265 = vmatpush1.msra.mxu0 %v1249
    %1266 = vmatprep.subr.mxu0 0.0
    %1267 = vmatpush1.msra.mxu0 %v1248
    %1268 = vmatprep.subr.mxu0 0.0
    %1269 = vmatpush1.msra.mxu0 %v1247
    %1270 = vmatprep.subr.mxu0 0.0
    %1271 = vmatpush1.msra.mxu0 %v1246
    %1272 = vmatprep.subr.mxu0 0.0
    %1273 = vmatpush1.msra.mxu0 %v1245
    %1274 = vmatprep.subr.mxu0 0.0
    %1275 = vmatpush1.msra.mxu0 %v1244
    %1276 = vmatprep.subr.mxu0 0.0
    %1277 = vmatpush1.msra.mxu0 %v1243
    %1278 = vmatprep.subr.mxu0 0.0
    %1279 = vmatpush1.msra.mxu0 %v1242
    %1280 = vmatprep.subr.mxu0 0.0
    %1281 = vmatpush1.msra.mxu0 %v1241
    %1282 = vmatprep.subr.mxu0 0.0
    %1283 = vmatpush1.msra.mxu0 %v1240
    %1284 = vmatprep.subr.mxu0 0.0
    %1285 = vmatpush1.msra.mxu0 %v1239
    %1286 = vmatprep.subr.mxu0 0.0
    %1287 = vmatpush1.msra.mxu0 %v1238
    %1288 = vmatprep.subr.mxu0 0.0
    %1289 = vmatpush1.msra.mxu0 %v1237
    %1290 = vmatprep.subr.mxu0 0.0
    %1291 = vmatpush2.msra.mxu0 0.0
    %1292 = vmatprep.subr.mxu0 0.0
    %1293 = vmatpush2.msra.mxu0 0.0
    %1294 = vmatprep.subr.mxu0 0.0
    %1295 = vmatpush2.msra.mxu0 0.0
    %1296 = vmatprep.subr.mxu0 0.0
    %1297 = vmatpush2.msra.mxu0 0.0
    %1298 = vmatprep.subr.mxu0 0.0
    %1299 = vmatpush2.msra.mxu0 0.0
    %1300 = vmatprep.subr.mxu0 0.0
    %1301 = vmatpush2.msra.mxu0 0.0
    %1302 = vmatprep.subr.mxu0 0.0
    %1303 = vmatpush2.msra.mxu0 0.0
    %1304 = vmatprep.subr.mxu0 0.0
    %1305 = vmatpush2.msra.mxu0 0.0
    %1306 = vmatprep.subr.mxu0 0.0
    %1307 = vmatpush2.msra.mxu0 0.0
    %1308 = vmatprep.subr.mxu0 0.0
    %1309 = vmatpush2.msra.mxu0 0.0
    %1310 = vmatprep.subr.mxu0 0.0
    %1311 = vmatpush2.msra.mxu0 0.0
    %1312 = vmatprep.subr.mxu0 0.0
    %1313 = vmatpush2.msra.mxu0 0.0
    %1314 = vmatprep.subr.mxu0 0.0
    %1315 = vmatpush2.msra.mxu0 0.0
    %1316 = vmatprep.subr.mxu0 0.0
    %1317 = vmatpush2.msra.mxu0 0.0
    %1318 = vmatprep.subr.mxu0 0.0
    %1319 = vmatpush2.msra.mxu0 0.0
    %1320 = vmatprep.subr.mxu0 0.0
    %1321 = vmatpush2.msra.mxu0 0.0
    %1322 = vmatprep.mubr.f32.mxu0 0.0
    %1323 = vmatmul.mubr.f32.gmra.mxu0 %v916
    %v1324 = vpop.f32.mrf.mxu0
    %v1325 = vadd.f32 %v1257, %v1324
    %v1326 = vpop.f32.mrf.mxu0
    %1327 = vdwg.mxu0
    %v1328 = vmul.f32 %v1325, 0.5
    %v1329 = vmul.f32 %v1325, 0.70710677
    %v1330 = verf.f32.pop %v1329
    %v1331 = vadd.f32 %v1330, 1.0
    %v1332 = vmul.f32 %v1328, %v1331
    %v1333 = vld [vmem:[#allocation10 + $0x3] sm:$0x1]
    %v1334 = vlaneseq
    %v1335 = vshrl.u32 %v1334, 7
    %v1336 = vsub.s32 0, %v1335
    %v1337 = vrot.slane %v1333, %v1336
    %v1338 = vmul.f32 %v1332, %v1337
    %v1339 = vsel %vm1020, %v1338, 0.0
    %1340 = vadd.xlane.f32.xlu0 %v1339
    %v1341 = vpop.xlane.xlu0 %1340
    %s1342 = scalar_lea.vmem %s3, 512
    %v1343 = vld [vmem:[%s1342] sm:$0xff]
    %v1344 = vld [vmem:[%s1342 + $0x8] sm:$0xff]
    %v1345 = vld [vmem:[%s1342 + $0x10] sm:$0xff]
    %v1346 = vld [vmem:[%s1342 + $0x18] sm:$0xff]
    %v1347 = vld [vmem:[%s1342 + $0x20] sm:$0xff]
    %v1348 = vld [vmem:[%s1342 + $0x28] sm:$0xff]
    %v1349 = vld [vmem:[%s1342 + $0x30] sm:$0xff]
    %v1350 = vld [vmem:[%s1342 + $0x38] sm:$0xff]
    %v1351 = vld [vmem:[%s1342 + $0x40] sm:$0xff]
    %v1352 = vld [vmem:[%s1342 + $0x48] sm:$0xff]
    %v1353 = vld [vmem:[%s1342 + $0x50] sm:$0xff]
    %v1354 = vld [vmem:[%s1342 + $0x58] sm:$0xff]
    %v1355 = vld [vmem:[%s1342 + $0x60] sm:$0xff]
    %v1356 = vld [vmem:[%s1342 + $0x68] sm:$0xff]
    %v1357 = vld [vmem:[%s1342 + $0x70] sm:$0xff]
    %v1358 = vld [vmem:[%s1342 + $0x78] sm:$0xff]
    %v1359 = vld [vmem:[#allocation8 + $0x4] sm:$0x1]
    %v1360 = vlaneseq
    %v1361 = vshrl.u32 %v1360, 7
    %v1362 = vsub.s32 0, %v1361
    %v1363 = vrot.slane %v1359, %v1362
    %1364 = vmatprep.subr.mxu0 0.0
    %1365 = vmatpush1.msra.mxu0 %v1358
    %1366 = vmatprep.subr.mxu0 0.0
    %1367 = vmatpush1.msra.mxu0 %v1357
    %1368 = vmatprep.subr.mxu0 0.0
    %1369 = vmatpush1.msra.mxu0 %v1356
    %1370 = vmatprep.subr.mxu0 0.0
    %1371 = vmatpush1.msra.mxu0 %v1355
    %1372 = vmatprep.subr.mxu0 0.0
    %1373 = vmatpush1.msra.mxu0 %v1354
    %1374 = vmatprep.subr.mxu0 0.0
    %1375 = vmatpush1.msra.mxu0 %v1353
    %1376 = vmatprep.subr.mxu0 0.0
    %1377 = vmatpush1.msra.mxu0 %v1352
    %1378 = vmatprep.subr.mxu0 0.0
    %1379 = vmatpush1.msra.mxu0 %v1351
    %1380 = vmatprep.subr.mxu0 0.0
    %1381 = vmatpush1.msra.mxu0 %v1350
    %1382 = vmatprep.subr.mxu0 0.0
    %1383 = vmatpush1.msra.mxu0 %v1349
    %1384 = vmatprep.subr.mxu0 0.0
    %1385 = vmatpush1.msra.mxu0 %v1348
    %1386 = vmatprep.subr.mxu0 0.0
    %1387 = vmatpush1.msra.mxu0 %v1347
    %1388 = vmatprep.subr.mxu0 0.0
    %1389 = vmatpush1.msra.mxu0 %v1346
    %1390 = vmatprep.subr.mxu0 0.0
    %1391 = vmatpush1.msra.mxu0 %v1345
    %1392 = vmatprep.subr.mxu0 0.0
    %1393 = vmatpush1.msra.mxu0 %v1344
    %1394 = vmatprep.subr.mxu0 0.0
    %1395 = vmatpush1.msra.mxu0 %v1343
    %1396 = vmatprep.subr.mxu0 0.0
    %1397 = vmatpush2.msra.mxu0 0.0
    %1398 = vmatprep.subr.mxu0 0.0
    %1399 = vmatpush2.msra.mxu0 0.0
    %1400 = vmatprep.subr.mxu0 0.0
    %1401 = vmatpush2.msra.mxu0 0.0
    %1402 = vmatprep.subr.mxu0 0.0
    %1403 = vmatpush2.msra.mxu0 0.0
    %1404 = vmatprep.subr.mxu0 0.0
    %1405 = vmatpush2.msra.mxu0 0.0
    %1406 = vmatprep.subr.mxu0 0.0
    %1407 = vmatpush2.msra.mxu0 0.0
    %1408 = vmatprep.subr.mxu0 0.0
    %1409 = vmatpush2.msra.mxu0 0.0
    %1410 = vmatprep.subr.mxu0 0.0
    %1411 = vmatpush2.msra.mxu0 0.0
    %1412 = vmatprep.subr.mxu0 0.0
    %1413 = vmatpush2.msra.mxu0 0.0
    %1414 = vmatprep.subr.mxu0 0.0
    %1415 = vmatpush2.msra.mxu0 0.0
    %1416 = vmatprep.subr.mxu0 0.0
    %1417 = vmatpush2.msra.mxu0 0.0
    %1418 = vmatprep.subr.mxu0 0.0
    %1419 = vmatpush2.msra.mxu0 0.0
    %1420 = vmatprep.subr.mxu0 0.0
    %1421 = vmatpush2.msra.mxu0 0.0
    %1422 = vmatprep.subr.mxu0 0.0
    %1423 = vmatpush2.msra.mxu0 0.0
    %1424 = vmatprep.subr.mxu0 0.0
    %1425 = vmatpush2.msra.mxu0 0.0
    %1426 = vmatprep.subr.mxu0 0.0
    %1427 = vmatpush2.msra.mxu0 0.0
    %1428 = vmatprep.mubr.f32.mxu0 0.0
    %1429 = vmatmul.mubr.f32.gmra.mxu0 %v917
    %v1430 = vpop.f32.mrf.mxu0
    %v1431 = vadd.f32 %v1363, %v1430
    %v1432 = vpop.f32.mrf.mxu0
    %1433 = vdwg.mxu0
    %v1434 = vmul.f32 %v1431, 0.5
    %v1435 = vmul.f32 %v1431, 0.70710677
    %v1436 = verf.f32.pop %v1435
    %v1437 = vadd.f32 %v1436, 1.0
    %v1438 = vmul.f32 %v1434, %v1437
    %v1439 = vld [vmem:[#allocation10 + $0x4] sm:$0x1]
    %v1440 = vlaneseq
    %v1441 = vshrl.u32 %v1440, 7
    %v1442 = vsub.s32 0, %v1441
    %v1443 = vrot.slane %v1439, %v1442
    %v1444 = vmul.f32 %v1438, %v1443
    %v1445 = vsel %vm1020, %v1444, 0.0
    %1446 = vadd.xlane.f32.xlu0 %v1445
    %v1447 = vpop.xlane.xlu0 %1446
    %vm1448 = vcmask 7168
    %v1449 = vsel %vm1448, %v1023, %v1129
    %vm1450 = vcmask 15360
    %v1451 = vsel %vm1450, %v1449, %v1235
    %vm1452 = vcmask 23552
    %v1453 = vsel %vm1452, %v1451, %v1341
    %vm1454 = vcmask 31744
    %v1455 = vsel %vm1454, %v1453, %v1447
    %v1456 = vld [vmem:[#allocation11] sm:$0x1]
    %v1458 = vlaneseq
    %v1459 = vshrl.u32 %v1458, 7
    %v1460 = vsub.s32 0, %v1459
    %v1461 = vrot.slane %v1456, %v1460
    %v1463 = vadd.f32 %v1455, %v1461
    %vm1464 = vcmask 33792
    %1465 = vst.msk [vmem:[#allocation13] sm:$0x3] %vm1464, %v1463
    // Predicated region
    $region54: #{tpu_custom_call.1} parent=1 // pred_check
      _
    $region55: #{tpu_custom_call.1} parent=1 // pred_check_branch
      %1467 = sbr.rel (0) target = $region57
    $region56: #{tpu_custom_call.1} parent=1 // pred_region
      %s1469 = ssub.s32 32, 32
      %1470 = vsyncadd [#allocation4], %s1469
      %s1472 = sshll.u32 [#allocation13], 4
      %s1473 = int_to_ptr.vmem [resolvable:$true] %s1472
      %1475 = dma.vmem_to_hbm [thread:$0]  %s1473, 32, %s7, [#allocation4]
    $region57: #{tpu_custom_call.1} parent=1 // pred_fallthru
      _
    // Predicated region
    $region58: #{tpu_custom_call.1} parent=1 // pred_check
      _
    $region59: #{tpu_custom_call.1} parent=1 // pred_check_branch
      %1477 = sbr.rel (0) target = $region61
    $region60: #{tpu_custom_call.1} parent=1 // pred_region
      %1478 = dma.done [#allocation4], 32
    $region61: #{tpu_custom_call.1} parent=1 // pred_fallthru
      _
    %1479 = vsyncpa [#allocation3], 1
    %1480 = vsyncpa [#allocation6], 1
    %1481 = vsyncpa [#allocation9], 1
    %1482 = vsyncpa [#allocation12], 1
    %1483 = vsyncpa [#allocation4], 1

</llo_original>
